<compile_context>
chip_gen: v6e
topology: v6e:2x2x1
jax: 0.10.0
libtpu: 0.0.40
codegen_flags: <defaults>
</compile_context>

<pallas_src>
import functools
import math

import jax
import jax.numpy as jnp
from jax.experimental import pallas as pl
from jax.experimental.pallas import tpu as pltpu


# ----------------------------------------------------------------------------
# Kernel
# ----------------------------------------------------------------------------
def attention_kernel(x_ref, wq_ref, wk_ref, wv_ref, wo_ref, bo_ref, o_ref, *,
                     heads, dim_head):
    bb, n, d = x_ref.shape                 # (batch tile, seq, dim)
    inner = heads * dim_head
    mm = wq_ref.dtype                      # MXU operand dtype (bf16 fast / f32 exact)

    # ---- QKV projection: full-width matmuls (bb*n, D) @ (D, inner) ----------
    # Softmax scale is pre-folded into wq wrapper-side.
    x2 = x_ref[...].reshape(bb * n, d).astype(mm)
    q = jnp.dot(x2, wq_ref[...], preferred_element_type=jnp.float32)   # (bb*n, inner)
    k = jnp.dot(x2, wk_ref[...], preferred_element_type=jnp.float32)
    v = jnp.dot(x2, wv_ref[...], preferred_element_type=jnp.float32)

    # ---- (bb*n, inner) -> (heads*bb, n, dh) head-major ----------------------
    # Static lane slices + leading-dim stack (no 4-D transposes).
    def split_heads(t):
        parts = [t[:, h * dim_head:(h + 1) * dim_head] for h in range(heads)]
        return jnp.stack(parts, axis=0).reshape(heads * bb, n, dim_head)

    qh, kh, vh = split_heads(q), split_heads(k), split_heads(v)

    # ---- Attention core: single-batch-dim batched matmuls -------------------
    s = jnp.einsum('gik,gjk->gij', qh.astype(mm), kh.astype(mm),
                   preferred_element_type=jnp.float32)                 # (g, n, n)
    s = s - jnp.max(s, axis=-1, keepdims=True)                         # f32 softmax math
    p = jnp.exp(s)
    l = jnp.sum(p, axis=-1, keepdims=True)                             # (g, n, 1)

    ctx = jnp.einsum('gij,gjk->gik', p.astype(mm), vh.astype(mm),
                     preferred_element_type=jnp.float32)               # (g, n, dh)
    # Post-PV normalization: multiply on (g, n, dh), not on (g, n, n).
    ctx = ctx * pl.reciprocal(l, approx=True)

    # ---- Merge heads (lane concat) + single output projection K=inner -------
    ctx4 = ctx.reshape(heads, bb, n, dim_head)
    ctx_cat = jnp.concatenate([ctx4[h] for h in range(heads)], axis=-1)  # (bb, n, inner)
    out = jnp.dot(ctx_cat.reshape(bb * n, inner).astype(mm), wo_ref[...],
                  preferred_element_type=jnp.float32) + bo_ref[...]      # (bb*n, d)

    # Dropout p=0.0 in the reference -> identity.
    o_ref[...] = out.reshape(bb, n, d).astype(o_ref.dtype)


# ----------------------------------------------------------------------------
# Wrapper
# ----------------------------------------------------------------------------
def _full_spec_2d(a):
    return pl.BlockSpec(a.shape, lambda i: (0, 0))


def _choose_block_b(B, N, max_rows=512):
    # Fold several sequences per grid step (bigger matmul M, fewer ~0.35us
    # grid-step overheads), capped at ~512 rows.  Keep >= 2 grid steps when
    # B >= 2 so v7x's 2 TensorCores both get work via the "parallel" axis;
    # single-TC chips (v5e/v6e) may pass block_b=B to the wrapper instead.
    divisors = [c for c in range(1, B + 1) if B % c == 0]
    fits = [c for c in divisors if c * N <= max_rows]
    if not fits:
        return 1
    best = max(fits)
    if B >= 2 and best == B:
        smaller = [c for c in fits if c < B]
        if smaller and max(smaller) * 2 >= best:
            best = max(smaller)
    return best


def attention_forward(x, params, *, heads, dim_head, block_b=None,
                      compute_dtype=jnp.bfloat16, vmem_limit_bytes=None):
    B, N, D = x.shape
    inner = heads * dim_head
    scale = dim_head ** (-0.5)
    if block_b is None:
        block_b = _choose_block_b(B, N)
    assert B % block_b == 0

    # Wrapper-side (free) weight restructuring:
    #   w_qkv: (D, 3*inner) with y = x @ w_qkv  (== x @ W_torch.T), columns
    #   ordered [q | k | v], each head-major (h*dh + c).
    w_qkv = params["w_qkv"]
    wq = (w_qkv[:, :inner] * scale).astype(compute_dtype)   # scale folded into Wq
    wk = w_qkv[:, inner:2 * inner].astype(compute_dtype)
    wv = w_qkv[:, 2 * inner:].astype(compute_dtype)
    wo = params["w_out"].astype(compute_dtype)              # (inner, D)
    bo = params["b_out"].reshape(1, D).astype(jnp.float32)  # bias stays f32

    seq_spec = pl.BlockSpec((block_b, N, D), lambda i: (i, 0, 0))

    cp_kwargs = dict(dimension_semantics=("parallel",))
    if vmem_limit_bytes is not None:
        cp_kwargs["vmem_limit_bytes"] = vmem_limit_bytes

    return pl.pallas_call(
        functools.partial(attention_kernel, heads=heads, dim_head=dim_head),
        out_shape=jax.ShapeDtypeStruct((B, N, D), x.dtype),
        grid=(B // block_b,),
        in_specs=[
            seq_spec,
            _full_spec_2d(wq), _full_spec_2d(wk), _full_spec_2d(wv),
            _full_spec_2d(wo), _full_spec_2d(bo),
        ],
        out_specs=seq_spec,
        compiler_params=pltpu.CompilerParams(**cp_kwargs),
    )(x, wq, wk, wv, wo, bo)


# ----------------------------------------------------------------------------
# Pure-JAX reference (mirrors the PyTorch module)
# ----------------------------------------------------------------------------
def attention_reference(x, params, *, heads, dim_head):
    B, N, D = x.shape
    inner = heads * dim_head
    qkv = x @ params["w_qkv"]
    q, k, v = jnp.split(qkv, 3, axis=-1)

    def to_heads(t):
        return jnp.transpose(t.reshape(B, N, heads, dim_head), (0, 2, 1, 3))

    q, k, v = map(to_heads, (q, k, v))
    dots = jnp.einsum('bhid,bhjd->bhij', q, k) * dim_head ** (-0.5)
    attn = jax.nn.softmax(dots, axis=-1)
    out = jnp.einsum('bhij,bhjd->bhid', attn, v)
    out = jnp.transpose(out, (0, 2, 1, 3)).reshape(B, N, inner)
    return out @ params["w_out"] + params["b_out"].reshape(1, 1, D)


if __name__ == "__main__":
    # Small shapes consistent with the module's forward: x is (B, N, dim).
    B, N = 2, 8
    dim, heads, dim_head = 32, 4, 8
    inner = heads * dim_head

    key = jax.random.PRNGKey(0)
    kx, kqkv, kout, kb = jax.random.split(key, 4)
    x = jax.random.normal(kx, (B, N, dim), jnp.float32)
    params = {
        # to_qkv: Linear(dim, 3*inner, bias=False), stored as (dim, 3*inner)
        "w_qkv": jax.random.normal(kqkv, (dim, 3 * inner), jnp.float32)
                 * (1.0 / math.sqrt(dim)),
        # to_out: Linear(inner, dim) with bias (project_out since heads != 1)
        "w_out": jax.random.normal(kout, (inner, dim), jnp.float32)
                 * (1.0 / math.sqrt(inner)),
        "b_out": jax.random.normal(kb, (dim,), jnp.float32) * 0.01,
    }

    ref = attention_reference(x, params, heads=heads, dim_head=dim_head)

    # Exact-parity mode: f32 MXU operands.
    out_f32 = jax.block_until_ready(
        attention_forward(x, params, heads=heads, dim_head=dim_head,
                          compute_dtype=jnp.float32))
    assert out_f32.shape == (B, N, dim), out_f32.shape
    assert bool(jnp.all(jnp.isfinite(out_f32)))
    err_f32 = float(jnp.max(jnp.abs(out_f32 - ref)))
    assert jnp.allclose(out_f32, ref, rtol=1e-2, atol=1e-2), err_f32

    # Fast mode (default): bf16 MXU operands, f32 accumulation + f32 softmax.
    out_bf16 = jax.block_until_ready(
        attention_forward(x, params, heads=heads, dim_head=dim_head))
    assert out_bf16.shape == (B, N, dim), out_bf16.shape
    assert bool(jnp.all(jnp.isfinite(out_bf16)))
    err_bf16 = float(jnp.max(jnp.abs(out_bf16 - ref)))
    assert jnp.allclose(out_bf16, ref, rtol=1e-1, atol=1e-1), err_bf16

    print("KERNEL_OK")
</pallas_src>

<mosaic_0001>
module attributes {stable_mosaic.version = 11 : i64} {
  func.func @attention_kernel(%arg0: i32, %arg1: memref<1x8x32xf32, #tpu.memory_space<vmem>>, %arg2: memref<32x32xf32, #tpu.memory_space<vmem>>, %arg3: memref<32x32xf32, #tpu.memory_space<vmem>>, %arg4: memref<32x32xf32, #tpu.memory_space<vmem>>, %arg5: memref<32x32xf32, #tpu.memory_space<vmem>>, %arg6: memref<1x32xf32, #tpu.memory_space<vmem>>, %arg7: memref<1x8x32xf32, #tpu.memory_space<vmem>>) attributes {dimension_semantics = [#tpu.dimension_semantics<parallel>], iteration_bounds = array<i64: 2>, scalar_prefetch = 0 : i64, scratch_operands = 0 : i64, tpu.core_type = #tpu.core_type<tc>, window_params = [{transform_indices = @transform_0, window_bounds = array<i64: 1, 8, 32>}, {pipeline_mode = #tpu.pipeline_mode<synchronous>, transform_indices = @transform_1, window_bounds = array<i64: 32, 32>}, {pipeline_mode = #tpu.pipeline_mode<synchronous>, transform_indices = @transform_2, window_bounds = array<i64: 32, 32>}, {pipeline_mode = #tpu.pipeline_mode<synchronous>, transform_indices = @transform_3, window_bounds = array<i64: 32, 32>}, {pipeline_mode = #tpu.pipeline_mode<synchronous>, transform_indices = @transform_4, window_bounds = array<i64: 32, 32>}, {pipeline_mode = #tpu.pipeline_mode<synchronous>, transform_indices = @transform_5, window_bounds = array<i64: 1, 32>}, {transform_indices = @transform_6, window_bounds = array<i64: 1, 8, 32>}]} {
    %c0 = arith.constant 0 : index
    %c0_0 = arith.constant 0 : index
    %c0_1 = arith.constant 0 : index
    %0 = vector.load %arg1[%c0, %c0_0, %c0_1] : memref<1x8x32xf32, #tpu.memory_space<vmem>>, vector<1x8x32xf32>
    %1 = vector.shape_cast %0 : vector<1x8x32xf32> to vector<8x32xf32>
    %c0_2 = arith.constant 0 : index
    %c0_3 = arith.constant 0 : index
    %2 = vector.load %arg2[%c0_2, %c0_3] : memref<32x32xf32, #tpu.memory_space<vmem>>, vector<32x32xf32>
    %cst = arith.constant dense<0.000000e+00> : vector<8x32xf32>
    %3 = tpu.matmul %1, %2, %cst {dimension_numbers = #tpu.dot_dimension_numbers<[1], [0], [0], [1], [0, 0, 1, 1], [], []>} : vector<8x32xf32>, vector<32x32xf32>, vector<8x32xf32> -> vector<8x32xf32>
    %c0_4 = arith.constant 0 : index
    %c0_5 = arith.constant 0 : index
    %4 = vector.load %arg3[%c0_4, %c0_5] : memref<32x32xf32, #tpu.memory_space<vmem>>, vector<32x32xf32>
    %cst_6 = arith.constant dense<0.000000e+00> : vector<8x32xf32>
    %5 = tpu.matmul %1, %4, %cst_6 {dimension_numbers = #tpu.dot_dimension_numbers<[1], [0], [0], [1], [0, 0, 1, 1], [], []>} : vector<8x32xf32>, vector<32x32xf32>, vector<8x32xf32> -> vector<8x32xf32>
    %c0_7 = arith.constant 0 : index
    %c0_8 = arith.constant 0 : index
    %6 = vector.load %arg4[%c0_7, %c0_8] : memref<32x32xf32, #tpu.memory_space<vmem>>, vector<32x32xf32>
    %cst_9 = arith.constant dense<0.000000e+00> : vector<8x32xf32>
    %7 = tpu.matmul %1, %6, %cst_9 {dimension_numbers = #tpu.dot_dimension_numbers<[1], [0], [0], [1], [0, 0, 1, 1], [], []>} : vector<8x32xf32>, vector<32x32xf32>, vector<8x32xf32> -> vector<8x32xf32>
    %8 = vector.extract_strided_slice %3 {offsets = [0, 0], sizes = [8, 8], strides = [1, 1]} : vector<8x32xf32> to vector<8x8xf32>
    %9 = vector.extract_strided_slice %3 {offsets = [0, 8], sizes = [8, 8], strides = [1, 1]} : vector<8x32xf32> to vector<8x8xf32>
    %10 = vector.extract_strided_slice %3 {offsets = [0, 16], sizes = [8, 8], strides = [1, 1]} : vector<8x32xf32> to vector<8x8xf32>
    %11 = vector.extract_strided_slice %3 {offsets = [0, 24], sizes = [8, 8], strides = [1, 1]} : vector<8x32xf32> to vector<8x8xf32>
    %12 = vector.shape_cast %8 : vector<8x8xf32> to vector<1x8x8xf32>
    %13 = vector.shape_cast %9 : vector<8x8xf32> to vector<1x8x8xf32>
    %14 = vector.shape_cast %10 : vector<8x8xf32> to vector<1x8x8xf32>
    %15 = vector.shape_cast %11 : vector<8x8xf32> to vector<1x8x8xf32>
    %16 = tpu.concatenate %12, %13, %14, %15 in 0 : vector<1x8x8xf32>, vector<1x8x8xf32>, vector<1x8x8xf32>, vector<1x8x8xf32> -> vector<4x8x8xf32>
    %17 = vector.extract_strided_slice %5 {offsets = [0, 0], sizes = [8, 8], strides = [1, 1]} : vector<8x32xf32> to vector<8x8xf32>
    %18 = vector.extract_strided_slice %5 {offsets = [0, 8], sizes = [8, 8], strides = [1, 1]} : vector<8x32xf32> to vector<8x8xf32>
    %19 = vector.extract_strided_slice %5 {offsets = [0, 16], sizes = [8, 8], strides = [1, 1]} : vector<8x32xf32> to vector<8x8xf32>
    %20 = vector.extract_strided_slice %5 {offsets = [0, 24], sizes = [8, 8], strides = [1, 1]} : vector<8x32xf32> to vector<8x8xf32>
    %21 = vector.shape_cast %17 : vector<8x8xf32> to vector<1x8x8xf32>
    %22 = vector.shape_cast %18 : vector<8x8xf32> to vector<1x8x8xf32>
    %23 = vector.shape_cast %19 : vector<8x8xf32> to vector<1x8x8xf32>
    %24 = vector.shape_cast %20 : vector<8x8xf32> to vector<1x8x8xf32>
    %25 = tpu.concatenate %21, %22, %23, %24 in 0 : vector<1x8x8xf32>, vector<1x8x8xf32>, vector<1x8x8xf32>, vector<1x8x8xf32> -> vector<4x8x8xf32>
    %26 = vector.extract_strided_slice %7 {offsets = [0, 0], sizes = [8, 8], strides = [1, 1]} : vector<8x32xf32> to vector<8x8xf32>
    %27 = vector.extract_strided_slice %7 {offsets = [0, 8], sizes = [8, 8], strides = [1, 1]} : vector<8x32xf32> to vector<8x8xf32>
    %28 = vector.extract_strided_slice %7 {offsets = [0, 16], sizes = [8, 8], strides = [1, 1]} : vector<8x32xf32> to vector<8x8xf32>
    %29 = vector.extract_strided_slice %7 {offsets = [0, 24], sizes = [8, 8], strides = [1, 1]} : vector<8x32xf32> to vector<8x8xf32>
    %30 = vector.shape_cast %26 : vector<8x8xf32> to vector<1x8x8xf32>
    %31 = vector.shape_cast %27 : vector<8x8xf32> to vector<1x8x8xf32>
    %32 = vector.shape_cast %28 : vector<8x8xf32> to vector<1x8x8xf32>
    %33 = vector.shape_cast %29 : vector<8x8xf32> to vector<1x8x8xf32>
    %34 = tpu.concatenate %30, %31, %32, %33 in 0 : vector<1x8x8xf32>, vector<1x8x8xf32>, vector<1x8x8xf32>, vector<1x8x8xf32> -> vector<4x8x8xf32>
    "tpu.trace_start"() <{level = 10 : i32, message = "gik,gjk->gij"}> : () -> ()
    %cst_10 = arith.constant dense<0.000000e+00> : vector<4x8x8xf32>
    %35 = tpu.matmul %16, %25, %cst_10 {dimension_numbers = #tpu.dot_dimension_numbers<[2], [2], [1], [1], [0, 0, 0, 1, 1, 1], [0], [0]>} : vector<4x8x8xf32>, vector<4x8x8xf32>, vector<4x8x8xf32> -> vector<4x8x8xf32>
    "tpu.trace_stop"() : () -> ()
    %cst_11 = arith.constant dense<0xFF800000> : vector<4x8xf32>
    %36 = vector.multi_reduction <maximumf>, %35, %cst_11 [2] : vector<4x8x8xf32> to vector<4x8xf32>
    %37 = vector.shape_cast %36 : vector<4x8xf32> to vector<4x8x1xf32>
    %38 = vector.broadcast %37 : vector<4x8x1xf32> to vector<4x8x8xf32>
    %39 = arith.subf %35, %38 : vector<4x8x8xf32>
    %40 = math.exp %39 : vector<4x8x8xf32>
    %cst_12 = arith.constant dense<0.000000e+00> : vector<4x8xf32>
    %41 = vector.multi_reduction <add>, %40, %cst_12 [2] : vector<4x8x8xf32> to vector<4x8xf32>
    %42 = vector.shape_cast %41 : vector<4x8xf32> to vector<4x8x1xf32>
    "tpu.trace_start"() <{level = 10 : i32, message = "gij,gjk->gik"}> : () -> ()
    %cst_13 = arith.constant dense<0.000000e+00> : vector<4x8x8xf32>
    %43 = tpu.matmul %40, %34, %cst_13 {dimension_numbers = #tpu.dot_dimension_numbers<[2], [1], [1], [2], [0, 0, 0, 1, 1, 2], [0], [0]>} : vector<4x8x8xf32>, vector<4x8x8xf32>, vector<4x8x8xf32> -> vector<4x8x8xf32>
    "tpu.trace_stop"() : () -> ()
    %44 = tpu.reciprocal %42 {approx = true} : vector<4x8x1xf32> -> vector<4x8x1xf32>
    %45 = vector.broadcast %44 : vector<4x8x1xf32> to vector<4x8x8xf32>
    %46 = arith.mulf %43, %45 : vector<4x8x8xf32>
    %47 = vector.shape_cast %46 : vector<4x8x8xf32> to vector<4x1x8x8xf32>
    %48 = vector.extract_strided_slice %47 {offsets = [0, 0, 0, 0], sizes = [1, 1, 8, 8], strides = [1, 1, 1, 1]} : vector<4x1x8x8xf32> to vector<1x1x8x8xf32>
    %49 = vector.shape_cast %48 : vector<1x1x8x8xf32> to vector<1x8x8xf32>
    %50 = vector.extract_strided_slice %47 {offsets = [1, 0, 0, 0], sizes = [1, 1, 8, 8], strides = [1, 1, 1, 1]} : vector<4x1x8x8xf32> to vector<1x1x8x8xf32>
    %51 = vector.shape_cast %50 : vector<1x1x8x8xf32> to vector<1x8x8xf32>
    %52 = vector.extract_strided_slice %47 {offsets = [2, 0, 0, 0], sizes = [1, 1, 8, 8], strides = [1, 1, 1, 1]} : vector<4x1x8x8xf32> to vector<1x1x8x8xf32>
    %53 = vector.shape_cast %52 : vector<1x1x8x8xf32> to vector<1x8x8xf32>
    %54 = vector.extract_strided_slice %47 {offsets = [3, 0, 0, 0], sizes = [1, 1, 8, 8], strides = [1, 1, 1, 1]} : vector<4x1x8x8xf32> to vector<1x1x8x8xf32>
    %55 = vector.shape_cast %54 : vector<1x1x8x8xf32> to vector<1x8x8xf32>
    %56 = tpu.concatenate %49, %51, %53, %55 in 2 : vector<1x8x8xf32>, vector<1x8x8xf32>, vector<1x8x8xf32>, vector<1x8x8xf32> -> vector<1x8x32xf32>
    %57 = vector.shape_cast %56 : vector<1x8x32xf32> to vector<8x32xf32>
    %c0_14 = arith.constant 0 : index
    %c0_15 = arith.constant 0 : index
    %58 = vector.load %arg5[%c0_14, %c0_15] : memref<32x32xf32, #tpu.memory_space<vmem>>, vector<32x32xf32>
    %cst_16 = arith.constant dense<0.000000e+00> : vector<8x32xf32>
    %59 = tpu.matmul %57, %58, %cst_16 {dimension_numbers = #tpu.dot_dimension_numbers<[1], [0], [0], [1], [0, 0, 1, 1], [], []>} : vector<8x32xf32>, vector<32x32xf32>, vector<8x32xf32> -> vector<8x32xf32>
    %c0_17 = arith.constant 0 : index
    %c0_18 = arith.constant 0 : index
    %60 = vector.load %arg6[%c0_17, %c0_18] : memref<1x32xf32, #tpu.memory_space<vmem>>, vector<1x32xf32>
    %61 = vector.broadcast %60 : vector<1x32xf32> to vector<8x32xf32>
    %62 = arith.addf %59, %61 : vector<8x32xf32>
    %63 = vector.shape_cast %62 : vector<8x32xf32> to vector<1x8x32xf32>
    %c0_19 = arith.constant 0 : index
    %c0_20 = arith.constant 0 : index
    %c0_21 = arith.constant 0 : index
    %64 = vector.load %arg7[%c0_19, %c0_20, %c0_21] : memref<1x8x32xf32, #tpu.memory_space<vmem>>, vector<1x8x32xf32>
    tpu.vector_store %arg7[%c0_19, %c0_20, %c0_21], %63 {strides = array<i32>} : memref<1x8x32xf32, #tpu.memory_space<vmem>>, vector<1x8x32xf32>,
    return
  }
  func.func @transform_0(%arg0: i32) -> (i32, i32, i32) {
    %c0_i32 = arith.constant 0 : i32
    %c0_i32_0 = arith.constant 0 : i32
    %c0_i32_1 = arith.constant 0 : i32
    return %arg0, %c0_i32, %c0_i32_0 : i32, i32, i32
  }
  func.func @transform_1(%arg0: i32) -> (i32, i32) {
    %c0_i32 = arith.constant 0 : i32
    %c0_i32_0 = arith.constant 0 : i32
    %c0_i32_1 = arith.constant 0 : i32
    return %c0_i32, %c0_i32_0 : i32, i32
  }
  func.func @transform_2(%arg0: i32) -> (i32, i32) {
    %c0_i32 = arith.constant 0 : i32
    %c0_i32_0 = arith.constant 0 : i32
    %c0_i32_1 = arith.constant 0 : i32
    return %c0_i32, %c0_i32_0 : i32, i32
  }
  func.func @transform_3(%arg0: i32) -> (i32, i32) {
    %c0_i32 = arith.constant 0 : i32
    %c0_i32_0 = arith.constant 0 : i32
    %c0_i32_1 = arith.constant 0 : i32
    return %c0_i32, %c0_i32_0 : i32, i32
  }
  func.func @transform_4(%arg0: i32) -> (i32, i32) {
    %c0_i32 = arith.constant 0 : i32
    %c0_i32_0 = arith.constant 0 : i32
    %c0_i32_1 = arith.constant 0 : i32
    return %c0_i32, %c0_i32_0 : i32, i32
  }
  func.func @transform_5(%arg0: i32) -> (i32, i32) {
    %c0_i32 = arith.constant 0 : i32
    %c0_i32_0 = arith.constant 0 : i32
    %c0_i32_1 = arith.constant 0 : i32
    return %c0_i32, %c0_i32_0 : i32, i32
  }
  func.func @transform_6(%arg0: i32) -> (i32, i32, i32) {
    %c0_i32 = arith.constant 0 : i32
    %c0_i32_0 = arith.constant 0 : i32
    %c0_i32_1 = arith.constant 0 : i32
    return %arg0, %c0_i32, %c0_i32_0 : i32, i32, i32
  }
}

</mosaic_0001>

<llo_original>
// kernel: tpu_custom_call.1
$region0: #{tpu_custom_call.1}
  #allocation0 [shape = 'u32[]', space=smem, size = 0x4, offset = 0x4, fixed_abs, tag = 'smem constant byte address 0x4 - core index']
  #allocation1 [shape = 'u32[144,128]{1,0:T(1,128)}', space=vmem, size = 0x12000, scoped, tag = 'internal scratch']
  %s0 = inlined_call_operand.hbm [shape: f32[2,8,32], index: 0, kind: input, shape index: {}]
  %s1 = inlined_call_operand.hbm [shape: f32[32,32], index: 1, kind: input, shape index: {}]
  %s2 = inlined_call_operand.hbm [shape: f32[32,32], index: 2, kind: input, shape index: {}]
  %s3 = inlined_call_operand.hbm [shape: f32[32,32], index: 3, kind: input, shape index: {}]
  %s4 = inlined_call_operand.hbm [shape: f32[32,32], index: 4, kind: input, shape index: {}]
  %s5 = inlined_call_operand.vmem [shape: f32[1,32], index: 5, kind: input, shape index: {}]
  %s6 = inlined_call_operand.hbm [shape: f32[2,8,32], index: 6, kind: output, shape index: {}]
  %s7 = sld [smem:[#allocation0]]
  $region77: #{tpu_custom_call.1} parent=0
    _
  %s9 = ssub.s32 1, %s7
  %s10 = scalar_select 0, %s9, %s7
  $region1: #{tpu_custom_call.1} parent=0
    #allocation2 [shape = 'u8[8192]{0}', space=vmem, size = 0x2000, scoped, tag = 'input window, operand 0']
    #allocation3 [shape = 's32[2]{0}', space=sflag, size = 0x8, scoped, tag = 'scoped memory for tpu_custom_call.1']
    #allocation4 [shape = 's32[2]{0}', space=sflag, size = 0x8, scoped, tag = 'scoped memory for tpu_custom_call.1']
    #allocation5 [shape = 'u8[16384]{0}', space=vmem, size = 0x4000, scoped, tag = 'input window, operand 1, single buffered']
    #allocation6 [shape = 's32[1]{0}', space=sflag, size = 0x4, scoped, tag = 'scoped memory for tpu_custom_call.1']
    #allocation7 [shape = 'u8[16384]{0}', space=vmem, size = 0x4000, scoped, tag = 'input window, operand 2, single buffered']
    #allocation8 [shape = 'u8[16384]{0}', space=vmem, size = 0x4000, scoped, tag = 'input window, operand 3, single buffered']
    #allocation9 [shape = 's32[1]{0}', space=sflag, size = 0x4, scoped, tag = 'scoped memory for tpu_custom_call.1']
    #allocation10 [shape = 'u8[16384]{0}', space=vmem, size = 0x4000, scoped, tag = 'input window, operand 4, single buffered']
    #allocation11 [shape = 'u8[8192]{0}', space=vmem, size = 0x2000, scoped, tag = 'output window, operand 0']
    %11 = vsyncpa [#allocation3], 0
    %s12 = scalar_lea.sflag [#allocation3], 1
    %13 = vsyncpa %s12, 0
    %14 = vsyncpa [#allocation6], 0
    %15 = vsyncpa [#allocation9], 0
    %16 = vsyncpa [#allocation4], 0
    %s17 = scalar_lea.sflag [#allocation4], 1
    %18 = vsyncpa %s17, 0
    loop: start=0, step=1, limit=4
    $region2: #{tpu_custom_call.1} parent=1 // loop_pre_header
      _
    $region3: #{tpu_custom_call.1} parent=1 // loop_header
      %s20 = sphi 0, %s24
      %p21 = scmp.ge.s32.totalorder %s20, 4
      %s30 = sphi 0, %s32
      %s33 = sphi 0, %s30
      %s34 = sphi 0, %s33
      %s50 = sphi 0, %s34
      %s54 = sphi 0, %s54
      %s56 = sphi 0, %s54
      %s57 = sphi 0, %s56
      %s71 = sphi 0, %s57
      %s75 = sphi 0, %s75
      %s77 = sphi 0, %s75
      %s78 = sphi 0, %s77
      %s92 = sphi 0, %s78
      %s96 = sphi 0, %s96
      %s98 = sphi 0, %s96
      %s99 = sphi 0, %s98
      %s113 = sphi 0, %s99
      %s117 = sphi 0, %s117
      %s119 = sphi 0, %s117
      %s120 = sphi 0, %s119
      %s134 = sphi 0, %s120
      %s138 = sphi 0, %s138
      %s140 = sphi 0, %s138
      %s141 = sphi 0, %s140
      %s155 = sphi 0, %s141
      %s161 = sphi 0, %s163
      %s164 = sphi 0, %s161
      %s165 = sphi 0, %s164
      %s181 = sphi 0, %s165
    $region4: #{tpu_custom_call.1} parent=1 // loop_header_branch
      %23 = sbr.rel (%p21) target = $region8
    $region5: #{tpu_custom_call.1} parent=1 // loop_body
      %s25 = ssub.s32 %s20, 1
      %s26 = ssub.s32 %s20, 2
      %s27 = sadd.s32 %s20, 1
      %s28 = ssub.s32 %s20, %s27
      %p29 = scmp.eq.s32.totalorder %s28, 0
      %s31 = sadd.s32 %s30, 1
      %s32 = scalar_select %p29, %s30, %s31
      %p35 = pneg %p29
      %p36 = scmp.eq.s32.totalorder %s20, 1
      %p37 = por %p35, %p36
      %p38 = scmp.ne.s32.totalorder %s30, %s33
      %p39 = scmp.eq.s32.totalorder %s20, 0
      %p40 = por %p38, %p39
      %p41 = scmp.ne.s32.totalorder %s30, %s33
      %p42 = scmp.eq.s32.totalorder %s25, 1
      %p43 = por %p41, %p42
      %p44 = scmp.ne.s32.totalorder %s33, %s34
      %p45 = scmp.eq.s32.totalorder %s25, 0
      %p46 = por %p44, %p45
      %p47 = scmp.ne.s32.totalorder %s33, %s34
      %p48 = scmp.eq.s32.totalorder %s26, 1
      %p49 = por %p47, %p48
      %p51 = scmp.ne.s32.totalorder %s34, %s50
      %p52 = scmp.eq.s32.totalorder %s26, 0
      %p53 = por %p51, %p52
      %s55 = sadd.s32 %s54, 1
      %p58 = scmp.eq.s32.totalorder %s20, 1
      %p59 = scmp.ne.s32.totalorder %s54, %s56
      %p60 = scmp.eq.s32.totalorder %s20, 0
      %p61 = por %p59, %p60
      %p62 = scmp.ne.s32.totalorder %s54, %s56
      %p63 = scmp.eq.s32.totalorder %s25, 1
      %p64 = por %p62, %p63
      %p65 = scmp.ne.s32.totalorder %s56, %s57
      %p66 = scmp.eq.s32.totalorder %s25, 0
      %p67 = por %p65, %p66
      %p68 = scmp.ne.s32.totalorder %s56, %s57
      %p69 = scmp.eq.s32.totalorder %s26, 1
      %p70 = por %p68, %p69
      %p72 = scmp.ne.s32.totalorder %s57, %s71
      %p73 = scmp.eq.s32.totalorder %s26, 0
      %p74 = por %p72, %p73
      %s76 = sadd.s32 %s75, 1
      %p79 = scmp.eq.s32.totalorder %s20, 1
      %p80 = scmp.ne.s32.totalorder %s75, %s77
      %p81 = scmp.eq.s32.totalorder %s20, 0
      %p82 = por %p80, %p81
      %p83 = scmp.ne.s32.totalorder %s75, %s77
      %p84 = scmp.eq.s32.totalorder %s25, 1
      %p85 = por %p83, %p84
      %p86 = scmp.ne.s32.totalorder %s77, %s78
      %p87 = scmp.eq.s32.totalorder %s25, 0
      %p88 = por %p86, %p87
      %p89 = scmp.ne.s32.totalorder %s77, %s78
      %p90 = scmp.eq.s32.totalorder %s26, 1
      %p91 = por %p89, %p90
      %p93 = scmp.ne.s32.totalorder %s78, %s92
      %p94 = scmp.eq.s32.totalorder %s26, 0
      %p95 = por %p93, %p94
      %s97 = sadd.s32 %s96, 1
      %p100 = scmp.eq.s32.totalorder %s20, 1
      %p101 = scmp.ne.s32.totalorder %s96, %s98
      %p102 = scmp.eq.s32.totalorder %s20, 0
      %p103 = por %p101, %p102
      %p104 = scmp.ne.s32.totalorder %s96, %s98
      %p105 = scmp.eq.s32.totalorder %s25, 1
      %p106 = por %p104, %p105
      %p107 = scmp.ne.s32.totalorder %s98, %s99
      %p108 = scmp.eq.s32.totalorder %s25, 0
      %p109 = por %p107, %p108
      %p110 = scmp.ne.s32.totalorder %s98, %s99
      %p111 = scmp.eq.s32.totalorder %s26, 1
      %p112 = por %p110, %p111
      %p114 = scmp.ne.s32.totalorder %s99, %s113
      %p115 = scmp.eq.s32.totalorder %s26, 0
      %p116 = por %p114, %p115
      %s118 = sadd.s32 %s117, 1
      %p121 = scmp.eq.s32.totalorder %s20, 1
      %p122 = scmp.ne.s32.totalorder %s117, %s119
      %p123 = scmp.eq.s32.totalorder %s20, 0
      %p124 = por %p122, %p123
      %p125 = scmp.ne.s32.totalorder %s117, %s119
      %p126 = scmp.eq.s32.totalorder %s25, 1
      %p127 = por %p125, %p126
      %p128 = scmp.ne.s32.totalorder %s119, %s120
      %p129 = scmp.eq.s32.totalorder %s25, 0
      %p130 = por %p128, %p129
      %p131 = scmp.ne.s32.totalorder %s119, %s120
      %p132 = scmp.eq.s32.totalorder %s26, 1
      %p133 = por %p131, %p132
      %p135 = scmp.ne.s32.totalorder %s120, %s134
      %p136 = scmp.eq.s32.totalorder %s26, 0
      %p137 = por %p135, %p136
      %s139 = sadd.s32 %s138, 1
      %p142 = scmp.eq.s32.totalorder %s20, 1
      %p143 = scmp.ne.s32.totalorder %s138, %s140
      %p144 = scmp.eq.s32.totalorder %s20, 0
      %p145 = por %p143, %p144
      %p146 = scmp.ne.s32.totalorder %s138, %s140
      %p147 = scmp.eq.s32.totalorder %s25, 1
      %p148 = por %p146, %p147
      %p149 = scmp.ne.s32.totalorder %s140, %s141
      %p150 = scmp.eq.s32.totalorder %s25, 0
      %p151 = por %p149, %p150
      %p152 = scmp.ne.s32.totalorder %s140, %s141
      %p153 = scmp.eq.s32.totalorder %s26, 1
      %p154 = por %p152, %p153
      %p156 = scmp.ne.s32.totalorder %s141, %s155
      %p157 = scmp.eq.s32.totalorder %s26, 0
      %p158 = por %p156, %p157
      %s159 = ssub.s32 %s20, %s27
      %p160 = scmp.eq.s32.totalorder %s159, 0
      %s162 = sadd.s32 %s161, 1
      %s163 = scalar_select %p160, %s161, %s162
      %p166 = pneg %p160
      %p167 = scmp.eq.s32.totalorder %s20, 1
      %p168 = por %p166, %p167
      %p169 = scmp.ne.s32.totalorder %s161, %s164
      %p170 = scmp.eq.s32.totalorder %s20, 0
      %p171 = por %p169, %p170
      %p172 = scmp.ne.s32.totalorder %s161, %s164
      %p173 = scmp.eq.s32.totalorder %s25, 1
      %p174 = por %p172, %p173
      %p175 = scmp.ne.s32.totalorder %s164, %s165
      %p176 = scmp.eq.s32.totalorder %s25, 0
      %p177 = por %p175, %p176
      %p178 = scmp.ne.s32.totalorder %s164, %s165
      %p179 = scmp.eq.s32.totalorder %s26, 1
      %p180 = por %p178, %p179
      %p182 = scmp.ne.s32.totalorder %s165, %s181
      %p183 = scmp.eq.s32.totalorder %s26, 0
      %p184 = por %p182, %p183
      %p185 = scmp.le.s32.totalorder 1, %s20
      %p186 = scmp.lt.s32.totalorder %s20, 3
      %p187 = pnand %p185, %p186
      %p188 = pneg %p187
      // Predicated region
      $region9: #{tpu_custom_call.1} parent=5 // pred_check
        _
      $region10: #{tpu_custom_call.1} parent=5 // pred_check_branch
        %190 = sbr.rel (%p187) target = $region12
      $region11: #{tpu_custom_call.1} parent=5 // pred_region
        %s191 = ssub.s32 %s20, 1
        // Predicated region
        $region13: #{tpu_custom_call.1} parent=11 // pred_check
          %p192 = pneg %p67
        $region14: #{tpu_custom_call.1} parent=11 // pred_check_branch
          %194 = sbr.rel (%p192) target = $region16
        $region15: #{tpu_custom_call.1} parent=11 // pred_region
          %s196 = ssub.s32 512, 512
          %197 = vsyncadd [#allocation6], %s196
          %s198 = sshll.u32 [#allocation5], 4
          %s199 = int_to_ptr.vmem [resolvable:$true] %s198
          %204 = dma.hbm_to_vmem [thread:$0]  %s1, 512, %s199, [#allocation6], 128, 128, 8
        $region16: #{tpu_custom_call.1} parent=11 // pred_fallthru
          _
        // Predicated region
        $region17: #{tpu_custom_call.1} parent=11 // pred_check
          %p205 = pneg %p88
        $region18: #{tpu_custom_call.1} parent=11 // pred_check_branch
          %207 = sbr.rel (%p205) target = $region20
        $region19: #{tpu_custom_call.1} parent=11 // pred_region
          %s209 = ssub.s32 512, 512
          %210 = vsyncadd [#allocation6], %s209
          %s211 = sshll.u32 [#allocation7], 4
          %s212 = int_to_ptr.vmem [resolvable:$true] %s211
          %217 = dma.hbm_to_vmem [thread:$0]  %s2, 512, %s212, [#allocation6], 128, 128, 8
        $region20: #{tpu_custom_call.1} parent=11 // pred_fallthru
          _
        // Predicated region
        $region21: #{tpu_custom_call.1} parent=11 // pred_check
          %p218 = pneg %p109
        $region22: #{tpu_custom_call.1} parent=11 // pred_check_branch
          %220 = sbr.rel (%p218) target = $region24
        $region23: #{tpu_custom_call.1} parent=11 // pred_region
          %s222 = ssub.s32 512, 512
          %223 = vsyncadd [#allocation9], %s222
          %s224 = sshll.u32 [#allocation8], 4
          %s225 = int_to_ptr.vmem [resolvable:$true] %s224
          %230 = dma.hbm_to_vmem [thread:$0]  %s3, 512, %s225, [#allocation9], 128, 128, 8
        $region24: #{tpu_custom_call.1} parent=11 // pred_fallthru
          _
        // Predicated region
        $region25: #{tpu_custom_call.1} parent=11 // pred_check
          %p231 = pneg %p130
        $region26: #{tpu_custom_call.1} parent=11 // pred_check_branch
          %233 = sbr.rel (%p231) target = $region28
        $region27: #{tpu_custom_call.1} parent=11 // pred_region
          %s235 = ssub.s32 512, 512
          %236 = vsyncadd [#allocation9], %s235
          %s237 = sshll.u32 [#allocation10], 4
          %s238 = int_to_ptr.vmem [resolvable:$true] %s237
          %243 = dma.hbm_to_vmem [thread:$0]  %s4, 512, %s238, [#allocation9], 128, 128, 8
        $region28: #{tpu_custom_call.1} parent=11 // pred_fallthru
          _
        // Predicated region
        $region29: #{tpu_custom_call.1} parent=11 // pred_check
          %p244 = pneg %p151
        $region30: #{tpu_custom_call.1} parent=11 // pred_check_branch
          %246 = sbr.rel (%p244) target = $region32
        $region31: #{tpu_custom_call.1} parent=11 // pred_region
          _
        $region32: #{tpu_custom_call.1} parent=11 // pred_fallthru
          _
      $region12: #{tpu_custom_call.1} parent=5 // pred_fallthru
        _
      %p247 = scmp.lt.s32.totalorder %s20, 2
      // Predicated region
      $region33: #{tpu_custom_call.1} parent=5 // pred_check
        %p248 = pneg %p247
      $region34: #{tpu_custom_call.1} parent=5 // pred_check_branch
        %250 = sbr.rel (%p248) target = $region36
      $region35: #{tpu_custom_call.1} parent=5 // pred_region
        // Predicated region
        $region37: #{tpu_custom_call.1} parent=35 // pred_check
          %p251 = pneg %p40
        $region38: #{tpu_custom_call.1} parent=35 // pred_check_branch
          %253 = sbr.rel (%p251) target = $region40
        $region39: #{tpu_custom_call.1} parent=35 // pred_region
          %s254 = sand.u32 %s30, 1
          %s255 = scalar_lea.sflag [#allocation3], %s254
          %s256 = sand.u32 %s30, 1
          %s257 = smul.addr %s256, 8
          %s258 = scalar_lea.vmem [#allocation2], %s257
          %s260 = ssub.s32 128, 128
          %261 = vsyncadd %s255, %s260
          %s262 = smul.addr %s20, 128
          %s263 = scalar_lea.hbm %s0, %s262
          %s265 = sshll.u32 %s258, 4
          %s266 = int_to_ptr.vmem [resolvable:$true] %s265
          %268 = dma.hbm_to_vmem [thread:$0]  %s263, 128, %s266, %s255
        $region40: #{tpu_custom_call.1} parent=35 // pred_fallthru
          _
      $region36: #{tpu_custom_call.1} parent=5 // pred_fallthru
        _
      %p269 = scmp.le.s32.totalorder 1, %s20
      %p270 = scmp.lt.s32.totalorder %s20, 3
      %p271 = pnand %p269, %p270
      %p272 = pneg %p271
      // Predicated region
      $region41: #{tpu_custom_call.1} parent=5 // pred_check
        _
      $region42: #{tpu_custom_call.1} parent=5 // pred_check_branch
        %274 = sbr.rel (%p271) target = $region44
      $region43: #{tpu_custom_call.1} parent=5 // pred_region
        %s275 = ssub.s32 %s20, 1
        %s276 = sand.u32 %s33, 1
        %s277 = scalar_lea.sflag [#allocation3], %s276
        %s278 = sand.u32 %s33, 1
        %s279 = smul.addr %s278, 8
        %s280 = scalar_lea.vmem [#allocation2], %s279
        // Predicated region
        $region45: #{tpu_custom_call.1} parent=43 // pred_check
          %p281 = pneg %p46
        $region46: #{tpu_custom_call.1} parent=43 // pred_check_branch
          %283 = sbr.rel (%p281) target = $region48
        $region47: #{tpu_custom_call.1} parent=43 // pred_region
          %284 = dma.done %s277, 128
        $region48: #{tpu_custom_call.1} parent=43 // pred_fallthru
          _
        // Predicated region
        $region49: #{tpu_custom_call.1} parent=43 // pred_check
          %p285 = pneg %p67
        $region50: #{tpu_custom_call.1} parent=43 // pred_check_branch
          %287 = sbr.rel (%p285) target = $region52
        $region51: #{tpu_custom_call.1} parent=43 // pred_region
          %288 = dma.done [#allocation6], 512
        $region52: #{tpu_custom_call.1} parent=43 // pred_fallthru
          _
        // Predicated region
        $region53: #{tpu_custom_call.1} parent=43 // pred_check
          %p289 = pneg %p88
        $region54: #{tpu_custom_call.1} parent=43 // pred_check_branch
          %291 = sbr.rel (%p289) target = $region56
        $region55: #{tpu_custom_call.1} parent=43 // pred_region
          %292 = dma.done [#allocation6], 512
        $region56: #{tpu_custom_call.1} parent=43 // pred_fallthru
          _
        // Predicated region
        $region57: #{tpu_custom_call.1} parent=43 // pred_check
          %p293 = pneg %p109
        $region58: #{tpu_custom_call.1} parent=43 // pred_check_branch
          %295 = sbr.rel (%p293) target = $region60
        $region59: #{tpu_custom_call.1} parent=43 // pred_region
          %296 = dma.done [#allocation9], 512
        $region60: #{tpu_custom_call.1} parent=43 // pred_fallthru
          _
        // Predicated region
        $region61: #{tpu_custom_call.1} parent=43 // pred_check
          %p297 = pneg %p130
        $region62: #{tpu_custom_call.1} parent=43 // pred_check_branch
          %299 = sbr.rel (%p297) target = $region64
        $region63: #{tpu_custom_call.1} parent=43 // pred_region
          %300 = dma.done [#allocation9], 512
        $region64: #{tpu_custom_call.1} parent=43 // pred_fallthru
          _
        %s301 = sand.u32 %s33, 1
        %s302 = scalar_lea.sflag [#allocation3], %s301
        %s303 = sand.u32 %s33, 1
        %s304 = smul.addr %s303, 8
        %s305 = scalar_lea.vmem [#allocation2], %s304
        %p306 = pneg %p46
        %p307 = pneg %p43
        %p308 = pneg %p67
        %p309 = pneg %p64
        %p310 = pneg %p88
        %p311 = pneg %p85
        %p312 = pneg %p109
        %p313 = pneg %p106
        %p314 = pneg %p130
        %p315 = pneg %p127
        %p316 = pneg %p151
        %p317 = pneg %p148
        %p318 = pneg %p177
        %p319 = pneg %p174
        %s320 = sand.u32 %s164, 1
        %s321 = scalar_lea.sflag [#allocation4], %s320
        %s322 = sand.u32 %s164, 1
        %s323 = smul.addr %s322, 8
        %s324 = scalar_lea.vmem [#allocation11], %s323
        %v325 = vld [vmem:[%s280] sm:$0xff]
        %v326 = vld [vmem:[#allocation5] sm:$0xff]
        %v327 = vld [vmem:[#allocation5 + $0x8] sm:$0xff]
        %v328 = vld [vmem:[#allocation5 + $0x10] sm:$0xff]
        %v329 = vld [vmem:[#allocation5 + $0x18] sm:$0xff]
        %vm330 = vcmask 261120
        %v332 = vsel %vm330, %v325, 0
        %334 = vmatprep.subr.mxu0 0.0
        %335 = vmatpush1.msra.mxu0 0.0
        %336 = vmatprep.subr.mxu0 0.0
        %337 = vmatpush1.msra.mxu0 0.0
        %338 = vmatprep.subr.mxu0 0.0
        %339 = vmatpush1.msra.mxu0 0.0
        %340 = vmatprep.subr.mxu0 0.0
        %341 = vmatpush1.msra.mxu0 0.0
        %342 = vmatprep.subr.mxu0 0.0
        %343 = vmatpush1.msra.mxu0 0.0
        %344 = vmatprep.subr.mxu0 0.0
        %345 = vmatpush1.msra.mxu0 0.0
        %346 = vmatprep.subr.mxu0 0.0
        %347 = vmatpush1.msra.mxu0 0.0
        %348 = vmatprep.subr.mxu0 0.0
        %349 = vmatpush1.msra.mxu0 0.0
        %350 = vmatprep.subr.mxu0 0.0
        %351 = vmatpush1.msra.mxu0 0.0
        %352 = vmatprep.subr.mxu0 0.0
        %353 = vmatpush1.msra.mxu0 0.0
        %354 = vmatprep.subr.mxu0 0.0
        %355 = vmatpush1.msra.mxu0 0.0
        %356 = vmatprep.subr.mxu0 0.0
        %357 = vmatpush1.msra.mxu0 0.0
        %358 = vmatprep.subr.mxu0 0.0
        %359 = vmatpush1.msra.mxu0 %v329
        %360 = vmatprep.subr.mxu0 0.0
        %361 = vmatpush1.msra.mxu0 %v328
        %362 = vmatprep.subr.mxu0 0.0
        %363 = vmatpush1.msra.mxu0 %v327
        %364 = vmatprep.subr.mxu0 0.0
        %365 = vmatpush1.msra.mxu0 %v326
        %366 = vmatprep.subr.mxu0 0.0
        %367 = vmatpush2.msra.mxu0 0.0
        %368 = vmatprep.subr.mxu0 0.0
        %369 = vmatpush2.msra.mxu0 0.0
        %370 = vmatprep.subr.mxu0 0.0
        %371 = vmatpush2.msra.mxu0 0.0
        %372 = vmatprep.subr.mxu0 0.0
        %373 = vmatpush2.msra.mxu0 0.0
        %374 = vmatprep.subr.mxu0 0.0
        %375 = vmatpush2.msra.mxu0 0.0
        %376 = vmatprep.subr.mxu0 0.0
        %377 = vmatpush2.msra.mxu0 0.0
        %378 = vmatprep.subr.mxu0 0.0
        %379 = vmatpush2.msra.mxu0 0.0
        %380 = vmatprep.subr.mxu0 0.0
        %381 = vmatpush2.msra.mxu0 0.0
        %382 = vmatprep.subr.mxu0 0.0
        %383 = vmatpush2.msra.mxu0 0.0
        %384 = vmatprep.subr.mxu0 0.0
        %385 = vmatpush2.msra.mxu0 0.0
        %386 = vmatprep.subr.mxu0 0.0
        %387 = vmatpush2.msra.mxu0 0.0
        %388 = vmatprep.subr.mxu0 0.0
        %389 = vmatpush2.msra.mxu0 0.0
        %390 = vmatprep.subr.mxu0 0.0
        %391 = vmatpush2.msra.mxu0 0.0
        %392 = vmatprep.subr.mxu0 0.0
        %393 = vmatpush2.msra.mxu0 0.0
        %394 = vmatprep.subr.mxu0 0.0
        %395 = vmatpush2.msra.mxu0 0.0
        %396 = vmatprep.subr.mxu0 0.0
        %397 = vmatpush2.msra.mxu0 0.0
        %398 = vmatprep.mubr.f32.mxu0 0.0
        %399 = vmatmul.mubr.f32.gmra.mxu0 %v332
        %v400 = vpop.f32.mrf.mxu0
        %v401 = vadd.f32 0.0, %v400
        %v402 = vpop.f32.mrf.mxu0
        %403 = vdwg.mxu0
        %v404 = vld [vmem:[#allocation7] sm:$0xff]
        %v405 = vld [vmem:[#allocation7 + $0x8] sm:$0xff]
        %v406 = vld [vmem:[#allocation7 + $0x10] sm:$0xff]
        %v407 = vld [vmem:[#allocation7 + $0x18] sm:$0xff]
        %408 = vmatprep.subr.mxu0 0.0
        %409 = vmatpush1.msra.mxu0 0.0
        %410 = vmatprep.subr.mxu0 0.0
        %411 = vmatpush1.msra.mxu0 0.0
        %412 = vmatprep.subr.mxu0 0.0
        %413 = vmatpush1.msra.mxu0 0.0
        %414 = vmatprep.subr.mxu0 0.0
        %415 = vmatpush1.msra.mxu0 0.0
        %416 = vmatprep.subr.mxu0 0.0
        %417 = vmatpush1.msra.mxu0 0.0
        %418 = vmatprep.subr.mxu0 0.0
        %419 = vmatpush1.msra.mxu0 0.0
        %420 = vmatprep.subr.mxu0 0.0
        %421 = vmatpush1.msra.mxu0 0.0
        %422 = vmatprep.subr.mxu0 0.0
        %423 = vmatpush1.msra.mxu0 0.0
        %424 = vmatprep.subr.mxu0 0.0
        %425 = vmatpush1.msra.mxu0 0.0
        %426 = vmatprep.subr.mxu0 0.0
        %427 = vmatpush1.msra.mxu0 0.0
        %428 = vmatprep.subr.mxu0 0.0
        %429 = vmatpush1.msra.mxu0 0.0
        %430 = vmatprep.subr.mxu0 0.0
        %431 = vmatpush1.msra.mxu0 0.0
        %432 = vmatprep.subr.mxu0 0.0
        %433 = vmatpush1.msra.mxu0 %v407
        %434 = vmatprep.subr.mxu0 0.0
        %435 = vmatpush1.msra.mxu0 %v406
        %436 = vmatprep.subr.mxu0 0.0
        %437 = vmatpush1.msra.mxu0 %v405
        %438 = vmatprep.subr.mxu0 0.0
        %439 = vmatpush1.msra.mxu0 %v404
        %440 = vmatprep.subr.mxu0 0.0
        %441 = vmatpush2.msra.mxu0 0.0
        %442 = vmatprep.subr.mxu0 0.0
        %443 = vmatpush2.msra.mxu0 0.0
        %444 = vmatprep.subr.mxu0 0.0
        %445 = vmatpush2.msra.mxu0 0.0
        %446 = vmatprep.subr.mxu0 0.0
        %447 = vmatpush2.msra.mxu0 0.0
        %448 = vmatprep.subr.mxu0 0.0
        %449 = vmatpush2.msra.mxu0 0.0
        %450 = vmatprep.subr.mxu0 0.0
        %451 = vmatpush2.msra.mxu0 0.0
        %452 = vmatprep.subr.mxu0 0.0
        %453 = vmatpush2.msra.mxu0 0.0
        %454 = vmatprep.subr.mxu0 0.0
        %455 = vmatpush2.msra.mxu0 0.0
        %456 = vmatprep.subr.mxu0 0.0
        %457 = vmatpush2.msra.mxu0 0.0
        %458 = vmatprep.subr.mxu0 0.0
        %459 = vmatpush2.msra.mxu0 0.0
        %460 = vmatprep.subr.mxu0 0.0
        %461 = vmatpush2.msra.mxu0 0.0
        %462 = vmatprep.subr.mxu0 0.0
        %463 = vmatpush2.msra.mxu0 0.0
        %464 = vmatprep.subr.mxu0 0.0
        %465 = vmatpush2.msra.mxu0 0.0
        %466 = vmatprep.subr.mxu0 0.0
        %467 = vmatpush2.msra.mxu0 0.0
        %468 = vmatprep.subr.mxu0 0.0
        %469 = vmatpush2.msra.mxu0 0.0
        %470 = vmatprep.subr.mxu0 0.0
        %471 = vmatpush2.msra.mxu0 0.0
        %472 = vmatprep.mubr.f32.mxu0 0.0
        %473 = vmatmul.mubr.f32.gmra.mxu0 %v332
        %v474 = vpop.f32.mrf.mxu0
        %v475 = vadd.f32 0.0, %v474
        %v476 = vpop.f32.mrf.mxu0
        %477 = vdwg.mxu0
        %v478 = vld [vmem:[#allocation8] sm:$0xff]
        %v479 = vld [vmem:[#allocation8 + $0x8] sm:$0xff]
        %v480 = vld [vmem:[#allocation8 + $0x10] sm:$0xff]
        %v481 = vld [vmem:[#allocation8 + $0x18] sm:$0xff]
        %482 = vmatprep.subr.mxu0 0.0
        %483 = vmatpush1.msra.mxu0 0.0
        %484 = vmatprep.subr.mxu0 0.0
        %485 = vmatpush1.msra.mxu0 0.0
        %486 = vmatprep.subr.mxu0 0.0
        %487 = vmatpush1.msra.mxu0 0.0
        %488 = vmatprep.subr.mxu0 0.0
        %489 = vmatpush1.msra.mxu0 0.0
        %490 = vmatprep.subr.mxu0 0.0
        %491 = vmatpush1.msra.mxu0 0.0
        %492 = vmatprep.subr.mxu0 0.0
        %493 = vmatpush1.msra.mxu0 0.0
        %494 = vmatprep.subr.mxu0 0.0
        %495 = vmatpush1.msra.mxu0 0.0
        %496 = vmatprep.subr.mxu0 0.0
        %497 = vmatpush1.msra.mxu0 0.0
        %498 = vmatprep.subr.mxu0 0.0
        %499 = vmatpush1.msra.mxu0 0.0
        %500 = vmatprep.subr.mxu0 0.0
        %501 = vmatpush1.msra.mxu0 0.0
        %502 = vmatprep.subr.mxu0 0.0
        %503 = vmatpush1.msra.mxu0 0.0
        %504 = vmatprep.subr.mxu0 0.0
        %505 = vmatpush1.msra.mxu0 0.0
        %506 = vmatprep.subr.mxu0 0.0
        %507 = vmatpush1.msra.mxu0 %v481
        %508 = vmatprep.subr.mxu0 0.0
        %509 = vmatpush1.msra.mxu0 %v480
        %510 = vmatprep.subr.mxu0 0.0
        %511 = vmatpush1.msra.mxu0 %v479
        %512 = vmatprep.subr.mxu0 0.0
        %513 = vmatpush1.msra.mxu0 %v478
        %514 = vmatprep.subr.mxu0 0.0
        %515 = vmatpush2.msra.mxu0 0.0
        %516 = vmatprep.subr.mxu0 0.0
        %517 = vmatpush2.msra.mxu0 0.0
        %518 = vmatprep.subr.mxu0 0.0
        %519 = vmatpush2.msra.mxu0 0.0
        %520 = vmatprep.subr.mxu0 0.0
        %521 = vmatpush2.msra.mxu0 0.0
        %522 = vmatprep.subr.mxu0 0.0
        %523 = vmatpush2.msra.mxu0 0.0
        %524 = vmatprep.subr.mxu0 0.0
        %525 = vmatpush2.msra.mxu0 0.0
        %526 = vmatprep.subr.mxu0 0.0
        %527 = vmatpush2.msra.mxu0 0.0
        %528 = vmatprep.subr.mxu0 0.0
        %529 = vmatpush2.msra.mxu0 0.0
        %530 = vmatprep.subr.mxu0 0.0
        %531 = vmatpush2.msra.mxu0 0.0
        %532 = vmatprep.subr.mxu0 0.0
        %533 = vmatpush2.msra.mxu0 0.0
        %534 = vmatprep.subr.mxu0 0.0
        %535 = vmatpush2.msra.mxu0 0.0
        %536 = vmatprep.subr.mxu0 0.0
        %537 = vmatpush2.msra.mxu0 0.0
        %538 = vmatprep.subr.mxu0 0.0
        %539 = vmatpush2.msra.mxu0 0.0
        %540 = vmatprep.subr.mxu0 0.0
        %541 = vmatpush2.msra.mxu0 0.0
        %542 = vmatprep.subr.mxu0 0.0
        %543 = vmatpush2.msra.mxu0 0.0
        %544 = vmatprep.subr.mxu0 0.0
        %545 = vmatpush2.msra.mxu0 0.0
        %546 = vmatprep.mubr.f32.mxu0 0.0
        %547 = vmatmul.mubr.f32.gmra.mxu0 %v332
        %v548 = vpop.f32.mrf.mxu0
        %v549 = vadd.f32 0.0, %v548
        %v550 = vpop.f32.mrf.mxu0
        %551 = vdwg.mxu0
        %553 = vrot.lane.b32.xlu0 %v401, 120
        %v554 = vpop.permute.xlu0 %553
        %555 = vrot.lane.b32.xlu0 %v401, 112
        %v556 = vpop.permute.xlu0 %555
        %557 = vrot.lane.b32.xlu0 %v401, 104
        %v558 = vpop.permute.xlu0 %557
        %560 = vrot.lane.b32.xlu0 %v475, 120
        %v561 = vpop.permute.xlu0 %560
        %562 = vrot.lane.b32.xlu0 %v475, 112
        %v563 = vpop.permute.xlu0 %562
        %564 = vrot.lane.b32.xlu0 %v475, 104
        %v565 = vpop.permute.xlu0 %564
        %567 = vrot.lane.b32.xlu0 %v549, 120
        %v568 = vpop.permute.xlu0 %567
        %570 = vrot.lane.b32.xlu0 %v549, 112
        %v571 = vpop.permute.xlu0 %570
        %573 = vrot.lane.b32.xlu0 %v549, 104
        %v574 = vpop.permute.xlu0 %573
        %vm576 = vcmask 64512
        %v577 = vsel %vm576, %v401, 0
        %v579 = vsel %vm576, %v475, 0
        %581 = vmatprep.subr.mxu0 0.0
        %582 = vmatpush1.xpose.msra.mxu0 0.0
        %583 = vmatprep.subr.mxu0 0.0
        %584 = vmatpush1.xpose.msra.mxu0 0.0
        %585 = vmatprep.subr.mxu0 0.0
        %586 = vmatpush1.xpose.msra.mxu0 0.0
        %587 = vmatprep.subr.mxu0 0.0
        %588 = vmatpush1.xpose.msra.mxu0 0.0
        %589 = vmatprep.subr.mxu0 0.0
        %590 = vmatpush1.xpose.msra.mxu0 0.0
        %591 = vmatprep.subr.mxu0 0.0
        %592 = vmatpush1.xpose.msra.mxu0 0.0
        %593 = vmatprep.subr.mxu0 0.0
        %594 = vmatpush1.xpose.msra.mxu0 0.0
        %595 = vmatprep.subr.mxu0 0.0
        %596 = vmatpush1.xpose.msra.mxu0 0.0
        %597 = vmatprep.subr.mxu0 0.0
        %598 = vmatpush1.xpose.msra.mxu0 0.0
        %599 = vmatprep.subr.mxu0 0.0
        %600 = vmatpush1.xpose.msra.mxu0 0.0
        %601 = vmatprep.subr.mxu0 0.0
        %602 = vmatpush1.xpose.msra.mxu0 0.0
        %603 = vmatprep.subr.mxu0 0.0
        %604 = vmatpush1.xpose.msra.mxu0 0.0
        %605 = vmatprep.subr.mxu0 0.0
        %606 = vmatpush1.xpose.msra.mxu0 0.0
        %607 = vmatprep.subr.mxu0 0.0
        %608 = vmatpush1.xpose.msra.mxu0 0.0
        %609 = vmatprep.subr.mxu0 0.0
        %610 = vmatpush1.xpose.msra.mxu0 0.0
        %611 = vmatprep.subr.mxu0 0.0
        %612 = vmatpush1.xpose.msra.mxu0 %v579
        %613 = vmatprep.subr.mxu0 0.0
        %614 = vmatpush2.xpose.msra.mxu0 0.0
        %615 = vmatprep.subr.mxu0 0.0
        %616 = vmatpush2.xpose.msra.mxu0 0.0
        %617 = vmatprep.subr.mxu0 0.0
        %618 = vmatpush2.xpose.msra.mxu0 0.0
        %619 = vmatprep.subr.mxu0 0.0
        %620 = vmatpush2.xpose.msra.mxu0 0.0
        %621 = vmatprep.subr.mxu0 0.0
        %622 = vmatpush2.xpose.msra.mxu0 0.0
        %623 = vmatprep.subr.mxu0 0.0
        %624 = vmatpush2.xpose.msra.mxu0 0.0
        %625 = vmatprep.subr.mxu0 0.0
        %626 = vmatpush2.xpose.msra.mxu0 0.0
        %627 = vmatprep.subr.mxu0 0.0
        %628 = vmatpush2.xpose.msra.mxu0 0.0
        %629 = vmatprep.subr.mxu0 0.0
        %630 = vmatpush2.xpose.msra.mxu0 0.0
        %631 = vmatprep.subr.mxu0 0.0
        %632 = vmatpush2.xpose.msra.mxu0 0.0
        %633 = vmatprep.subr.mxu0 0.0
        %634 = vmatpush2.xpose.msra.mxu0 0.0
        %635 = vmatprep.subr.mxu0 0.0
        %636 = vmatpush2.xpose.msra.mxu0 0.0
        %637 = vmatprep.subr.mxu0 0.0
        %638 = vmatpush2.xpose.msra.mxu0 0.0
        %639 = vmatprep.subr.mxu0 0.0
        %640 = vmatpush2.xpose.msra.mxu0 0.0
        %641 = vmatprep.subr.mxu0 0.0
        %642 = vmatpush2.xpose.msra.mxu0 0.0
        %643 = vmatprep.subr.mxu0 0.0
        %644 = vmatpush2.xpose.msra.mxu0 0.0
        %645 = vmatprep.mubr.f32.mxu0 0.0
        %646 = vmatmul.mubr.f32.gmra.mxu0 %v577
        %v647 = vpop.f32.mrf.mxu0
        %v648 = vadd.f32 0.0, %v647
        %v649 = vpop.f32.mrf.mxu0
        %650 = vdwg.mxu0
        %v651 = vsel %vm576, %v554, 0
        %v653 = vsel %vm576, %v561, 0
        %655 = vmatprep.subr.mxu0 0.0
        %656 = vmatpush1.xpose.msra.mxu0 0.0
        %657 = vmatprep.subr.mxu0 0.0
        %658 = vmatpush1.xpose.msra.mxu0 0.0
        %659 = vmatprep.subr.mxu0 0.0
        %660 = vmatpush1.xpose.msra.mxu0 0.0
        %661 = vmatprep.subr.mxu0 0.0
        %662 = vmatpush1.xpose.msra.mxu0 0.0
        %663 = vmatprep.subr.mxu0 0.0
        %664 = vmatpush1.xpose.msra.mxu0 0.0
        %665 = vmatprep.subr.mxu0 0.0
        %666 = vmatpush1.xpose.msra.mxu0 0.0
        %667 = vmatprep.subr.mxu0 0.0
        %668 = vmatpush1.xpose.msra.mxu0 0.0
        %669 = vmatprep.subr.mxu0 0.0
        %670 = vmatpush1.xpose.msra.mxu0 0.0
        %671 = vmatprep.subr.mxu0 0.0
        %672 = vmatpush1.xpose.msra.mxu0 0.0
        %673 = vmatprep.subr.mxu0 0.0
        %674 = vmatpush1.xpose.msra.mxu0 0.0
        %675 = vmatprep.subr.mxu0 0.0
        %676 = vmatpush1.xpose.msra.mxu0 0.0
        %677 = vmatprep.subr.mxu0 0.0
        %678 = vmatpush1.xpose.msra.mxu0 0.0
        %679 = vmatprep.subr.mxu0 0.0
        %680 = vmatpush1.xpose.msra.mxu0 0.0
        %681 = vmatprep.subr.mxu0 0.0
        %682 = vmatpush1.xpose.msra.mxu0 0.0
        %683 = vmatprep.subr.mxu0 0.0
        %684 = vmatpush1.xpose.msra.mxu0 0.0
        %685 = vmatprep.subr.mxu0 0.0
        %686 = vmatpush1.xpose.msra.mxu0 %v653
        %687 = vmatprep.subr.mxu0 0.0
        %688 = vmatpush2.xpose.msra.mxu0 0.0
        %689 = vmatprep.subr.mxu0 0.0
        %690 = vmatpush2.xpose.msra.mxu0 0.0
        %691 = vmatprep.subr.mxu0 0.0
        %692 = vmatpush2.xpose.msra.mxu0 0.0
        %693 = vmatprep.subr.mxu0 0.0
        %694 = vmatpush2.xpose.msra.mxu0 0.0
        %695 = vmatprep.subr.mxu0 0.0
        %696 = vmatpush2.xpose.msra.mxu0 0.0
        %697 = vmatprep.subr.mxu0 0.0
        %698 = vmatpush2.xpose.msra.mxu0 0.0
        %699 = vmatprep.subr.mxu0 0.0
        %700 = vmatpush2.xpose.msra.mxu0 0.0
        %701 = vmatprep.subr.mxu0 0.0
        %702 = vmatpush2.xpose.msra.mxu0 0.0
        %703 = vmatprep.subr.mxu0 0.0
        %704 = vmatpush2.xpose.msra.mxu0 0.0
        %705 = vmatprep.subr.mxu0 0.0
        %706 = vmatpush2.xpose.msra.mxu0 0.0
        %707 = vmatprep.subr.mxu0 0.0
        %708 = vmatpush2.xpose.msra.mxu0 0.0
        %709 = vmatprep.subr.mxu0 0.0
        %710 = vmatpush2.xpose.msra.mxu0 0.0
        %711 = vmatprep.subr.mxu0 0.0
        %712 = vmatpush2.xpose.msra.mxu0 0.0
        %713 = vmatprep.subr.mxu0 0.0
        %714 = vmatpush2.xpose.msra.mxu0 0.0
        %715 = vmatprep.subr.mxu0 0.0
        %716 = vmatpush2.xpose.msra.mxu0 0.0
        %717 = vmatprep.subr.mxu0 0.0
        %718 = vmatpush2.xpose.msra.mxu0 0.0
        %719 = vmatprep.mubr.f32.mxu0 0.0
        %720 = vmatmul.mubr.f32.gmra.mxu0 %v651
        %v721 = vpop.f32.mrf.mxu0
        %v722 = vadd.f32 0.0, %v721
        %v723 = vpop.f32.mrf.mxu0
        %724 = vdwg.mxu0
        %v725 = vsel %vm576, %v556, 0
        %v727 = vsel %vm576, %v563, 0
        %729 = vmatprep.subr.mxu0 0.0
        %730 = vmatpush1.xpose.msra.mxu0 0.0
        %731 = vmatprep.subr.mxu0 0.0
        %732 = vmatpush1.xpose.msra.mxu0 0.0
        %733 = vmatprep.subr.mxu0 0.0
        %734 = vmatpush1.xpose.msra.mxu0 0.0
        %735 = vmatprep.subr.mxu0 0.0
        %736 = vmatpush1.xpose.msra.mxu0 0.0
        %737 = vmatprep.subr.mxu0 0.0
        %738 = vmatpush1.xpose.msra.mxu0 0.0
        %739 = vmatprep.subr.mxu0 0.0
        %740 = vmatpush1.xpose.msra.mxu0 0.0
        %741 = vmatprep.subr.mxu0 0.0
        %742 = vmatpush1.xpose.msra.mxu0 0.0
        %743 = vmatprep.subr.mxu0 0.0
        %744 = vmatpush1.xpose.msra.mxu0 0.0
        %745 = vmatprep.subr.mxu0 0.0
        %746 = vmatpush1.xpose.msra.mxu0 0.0
        %747 = vmatprep.subr.mxu0 0.0
        %748 = vmatpush1.xpose.msra.mxu0 0.0
        %749 = vmatprep.subr.mxu0 0.0
        %750 = vmatpush1.xpose.msra.mxu0 0.0
        %751 = vmatprep.subr.mxu0 0.0
        %752 = vmatpush1.xpose.msra.mxu0 0.0
        %753 = vmatprep.subr.mxu0 0.0
        %754 = vmatpush1.xpose.msra.mxu0 0.0
        %755 = vmatprep.subr.mxu0 0.0
        %756 = vmatpush1.xpose.msra.mxu0 0.0
        %757 = vmatprep.subr.mxu0 0.0
        %758 = vmatpush1.xpose.msra.mxu0 0.0
        %759 = vmatprep.subr.mxu0 0.0
        %760 = vmatpush1.xpose.msra.mxu0 %v727
        %761 = vmatprep.subr.mxu0 0.0
        %762 = vmatpush2.xpose.msra.mxu0 0.0
        %763 = vmatprep.subr.mxu0 0.0
        %764 = vmatpush2.xpose.msra.mxu0 0.0
        %765 = vmatprep.subr.mxu0 0.0
        %766 = vmatpush2.xpose.msra.mxu0 0.0
        %767 = vmatprep.subr.mxu0 0.0
        %768 = vmatpush2.xpose.msra.mxu0 0.0
        %769 = vmatprep.subr.mxu0 0.0
        %770 = vmatpush2.xpose.msra.mxu0 0.0
        %771 = vmatprep.subr.mxu0 0.0
        %772 = vmatpush2.xpose.msra.mxu0 0.0
        %773 = vmatprep.subr.mxu0 0.0
        %774 = vmatpush2.xpose.msra.mxu0 0.0
        %775 = vmatprep.subr.mxu0 0.0
        %776 = vmatpush2.xpose.msra.mxu0 0.0
        %777 = vmatprep.subr.mxu0 0.0
        %778 = vmatpush2.xpose.msra.mxu0 0.0
        %779 = vmatprep.subr.mxu0 0.0
        %780 = vmatpush2.xpose.msra.mxu0 0.0
        %781 = vmatprep.subr.mxu0 0.0
        %782 = vmatpush2.xpose.msra.mxu0 0.0
        %783 = vmatprep.subr.mxu0 0.0
        %784 = vmatpush2.xpose.msra.mxu0 0.0
        %785 = vmatprep.subr.mxu0 0.0
        %786 = vmatpush2.xpose.msra.mxu0 0.0
        %787 = vmatprep.subr.mxu0 0.0
        %788 = vmatpush2.xpose.msra.mxu0 0.0
        %789 = vmatprep.subr.mxu0 0.0
        %790 = vmatpush2.xpose.msra.mxu0 0.0
        %791 = vmatprep.subr.mxu0 0.0
        %792 = vmatpush2.xpose.msra.mxu0 0.0
        %793 = vmatprep.mubr.f32.mxu0 0.0
        %794 = vmatmul.mubr.f32.gmra.mxu0 %v725
        %v795 = vpop.f32.mrf.mxu0
        %v796 = vadd.f32 0.0, %v795
        %v797 = vpop.f32.mrf.mxu0
        %798 = vdwg.mxu0
        %v799 = vsel %vm576, %v558, 0
        %v801 = vsel %vm576, %v565, 0
        %803 = vmatprep.subr.mxu0 0.0
        %804 = vmatpush1.xpose.msra.mxu0 0.0
        %805 = vmatprep.subr.mxu0 0.0
        %806 = vmatpush1.xpose.msra.mxu0 0.0
        %807 = vmatprep.subr.mxu0 0.0
        %808 = vmatpush1.xpose.msra.mxu0 0.0
        %809 = vmatprep.subr.mxu0 0.0
        %810 = vmatpush1.xpose.msra.mxu0 0.0
        %811 = vmatprep.subr.mxu0 0.0
        %812 = vmatpush1.xpose.msra.mxu0 0.0
        %813 = vmatprep.subr.mxu0 0.0
        %814 = vmatpush1.xpose.msra.mxu0 0.0
        %815 = vmatprep.subr.mxu0 0.0
        %816 = vmatpush1.xpose.msra.mxu0 0.0
        %817 = vmatprep.subr.mxu0 0.0
        %818 = vmatpush1.xpose.msra.mxu0 0.0
        %819 = vmatprep.subr.mxu0 0.0
        %820 = vmatpush1.xpose.msra.mxu0 0.0
        %821 = vmatprep.subr.mxu0 0.0
        %822 = vmatpush1.xpose.msra.mxu0 0.0
        %823 = vmatprep.subr.mxu0 0.0
        %824 = vmatpush1.xpose.msra.mxu0 0.0
        %825 = vmatprep.subr.mxu0 0.0
        %826 = vmatpush1.xpose.msra.mxu0 0.0
        %827 = vmatprep.subr.mxu0 0.0
        %828 = vmatpush1.xpose.msra.mxu0 0.0
        %829 = vmatprep.subr.mxu0 0.0
        %830 = vmatpush1.xpose.msra.mxu0 0.0
        %831 = vmatprep.subr.mxu0 0.0
        %832 = vmatpush1.xpose.msra.mxu0 0.0
        %833 = vmatprep.subr.mxu0 0.0
        %834 = vmatpush1.xpose.msra.mxu0 %v801
        %835 = vmatprep.subr.mxu0 0.0
        %836 = vmatpush2.xpose.msra.mxu0 0.0
        %837 = vmatprep.subr.mxu0 0.0
        %838 = vmatpush2.xpose.msra.mxu0 0.0
        %839 = vmatprep.subr.mxu0 0.0
        %840 = vmatpush2.xpose.msra.mxu0 0.0
        %841 = vmatprep.subr.mxu0 0.0
        %842 = vmatpush2.xpose.msra.mxu0 0.0
        %843 = vmatprep.subr.mxu0 0.0
        %844 = vmatpush2.xpose.msra.mxu0 0.0
        %845 = vmatprep.subr.mxu0 0.0
        %846 = vmatpush2.xpose.msra.mxu0 0.0
        %847 = vmatprep.subr.mxu0 0.0
        %848 = vmatpush2.xpose.msra.mxu0 0.0
        %849 = vmatprep.subr.mxu0 0.0
        %850 = vmatpush2.xpose.msra.mxu0 0.0
        %851 = vmatprep.subr.mxu0 0.0
        %852 = vmatpush2.xpose.msra.mxu0 0.0
        %853 = vmatprep.subr.mxu0 0.0
        %854 = vmatpush2.xpose.msra.mxu0 0.0
        %855 = vmatprep.subr.mxu0 0.0
        %856 = vmatpush2.xpose.msra.mxu0 0.0
        %857 = vmatprep.subr.mxu0 0.0
        %858 = vmatpush2.xpose.msra.mxu0 0.0
        %859 = vmatprep.subr.mxu0 0.0
        %860 = vmatpush2.xpose.msra.mxu0 0.0
        %861 = vmatprep.subr.mxu0 0.0
        %862 = vmatpush2.xpose.msra.mxu0 0.0
        %863 = vmatprep.subr.mxu0 0.0
        %864 = vmatpush2.xpose.msra.mxu0 0.0
        %865 = vmatprep.subr.mxu0 0.0
        %866 = vmatpush2.xpose.msra.mxu0 0.0
        %867 = vmatprep.mubr.f32.mxu0 0.0
        %868 = vmatmul.mubr.f32.gmra.mxu0 %v799
        %v869 = vpop.f32.mrf.mxu0
        %v870 = vadd.f32 0.0, %v869
        %v871 = vpop.f32.mrf.mxu0
        %872 = vdwg.mxu0
        %v873 = vsel %vm576, %v648, -inf
        %874 = vmax.xlane.f32.xlu0 %v873
        %v875 = vpop.xlane.xlu0 %874
        %v876 = vsel %vm576, %v722, -inf
        %877 = vmax.xlane.f32.xlu0 %v876
        %v878 = vpop.xlane.xlu0 %877
        %v879 = vsel %vm576, %v796, -inf
        %880 = vmax.xlane.f32.xlu0 %v879
        %v881 = vpop.xlane.xlu0 %880
        %v882 = vsel %vm576, %v870, -inf
        %883 = vmax.xlane.f32.xlu0 %v882
        %v884 = vpop.xlane.xlu0 %883
        %v885 = vsub.f32 %v648, %v875
        %v886 = vsub.f32 %v722, %v878
        %v887 = vsub.f32 %v796, %v881
        %v888 = vsub.f32 %v870, %v884
        %v889 = vmul.f32 %v885, 1.442695
        %v890 = vpow.pop %v889
        %v891 = vmul.f32 %v886, 1.442695
        %v892 = vpow.pop %v891
        %v893 = vmul.f32 %v887, 1.442695
        %v894 = vpow.pop %v893
        %v895 = vmul.f32 %v888, 1.442695
        %v896 = vpow.pop %v895
        %v897 = vsel %vm576, %v890, 0.0
        %898 = vadd.xlane.f32.xlu0 %v897
        %v899 = vpop.xlane.xlu0 %898
        %v900 = vsel %vm576, %v892, 0.0
        %901 = vadd.xlane.f32.xlu0 %v900
        %v902 = vpop.xlane.xlu0 %901
        %v903 = vsel %vm576, %v894, 0.0
        %904 = vadd.xlane.f32.xlu0 %v903
        %v905 = vpop.xlane.xlu0 %904
        %v906 = vsel %vm576, %v896, 0.0
        %907 = vadd.xlane.f32.xlu0 %v906
        %v908 = vpop.xlane.xlu0 %907
        %v910 = vsel %vm576, %v890, 0
        %912 = vmatprep.subr.mxu0 0.0
        %913 = vmatpush1.msra.mxu0 0.0
        %914 = vmatprep.subr.mxu0 0.0
        %915 = vmatpush1.msra.mxu0 0.0
        %916 = vmatprep.subr.mxu0 0.0
        %917 = vmatpush1.msra.mxu0 0.0
        %918 = vmatprep.subr.mxu0 0.0
        %919 = vmatpush1.msra.mxu0 0.0
        %920 = vmatprep.subr.mxu0 0.0
        %921 = vmatpush1.msra.mxu0 0.0
        %922 = vmatprep.subr.mxu0 0.0
        %923 = vmatpush1.msra.mxu0 0.0
        %924 = vmatprep.subr.mxu0 0.0
        %925 = vmatpush1.msra.mxu0 0.0
        %926 = vmatprep.subr.mxu0 0.0
        %927 = vmatpush1.msra.mxu0 0.0
        %928 = vmatprep.subr.mxu0 0.0
        %929 = vmatpush1.msra.mxu0 0.0
        %930 = vmatprep.subr.mxu0 0.0
        %931 = vmatpush1.msra.mxu0 0.0
        %932 = vmatprep.subr.mxu0 0.0
        %933 = vmatpush1.msra.mxu0 0.0
        %934 = vmatprep.subr.mxu0 0.0
        %935 = vmatpush1.msra.mxu0 0.0
        %936 = vmatprep.subr.mxu0 0.0
        %937 = vmatpush1.msra.mxu0 0.0
        %938 = vmatprep.subr.mxu0 0.0
        %939 = vmatpush1.msra.mxu0 0.0
        %940 = vmatprep.subr.mxu0 0.0
        %941 = vmatpush1.msra.mxu0 0.0
        %942 = vmatprep.subr.mxu0 0.0
        %943 = vmatpush1.msra.mxu0 %v549
        %944 = vmatprep.subr.mxu0 0.0
        %945 = vmatpush2.msra.mxu0 0.0
        %946 = vmatprep.subr.mxu0 0.0
        %947 = vmatpush2.msra.mxu0 0.0
        %948 = vmatprep.subr.mxu0 0.0
        %949 = vmatpush2.msra.mxu0 0.0
        %950 = vmatprep.subr.mxu0 0.0
        %951 = vmatpush2.msra.mxu0 0.0
        %952 = vmatprep.subr.mxu0 0.0
        %953 = vmatpush2.msra.mxu0 0.0
        %954 = vmatprep.subr.mxu0 0.0
        %955 = vmatpush2.msra.mxu0 0.0
        %956 = vmatprep.subr.mxu0 0.0
        %957 = vmatpush2.msra.mxu0 0.0
        %958 = vmatprep.subr.mxu0 0.0
        %959 = vmatpush2.msra.mxu0 0.0
        %960 = vmatprep.subr.mxu0 0.0
        %961 = vmatpush2.msra.mxu0 0.0
        %962 = vmatprep.subr.mxu0 0.0
        %963 = vmatpush2.msra.mxu0 0.0
        %964 = vmatprep.subr.mxu0 0.0
        %965 = vmatpush2.msra.mxu0 0.0
        %966 = vmatprep.subr.mxu0 0.0
        %967 = vmatpush2.msra.mxu0 0.0
        %968 = vmatprep.subr.mxu0 0.0
        %969 = vmatpush2.msra.mxu0 0.0
        %970 = vmatprep.subr.mxu0 0.0
        %971 = vmatpush2.msra.mxu0 0.0
        %972 = vmatprep.subr.mxu0 0.0
        %973 = vmatpush2.msra.mxu0 0.0
        %974 = vmatprep.subr.mxu0 0.0
        %975 = vmatpush2.msra.mxu0 0.0
        %976 = vmatprep.mubr.f32.mxu0 0.0
        %977 = vmatmul.mubr.f32.gmra.mxu0 %v910
        %v978 = vpop.f32.mrf.mxu0
        %v979 = vadd.f32 0.0, %v978
        %v980 = vpop.f32.mrf.mxu0
        %981 = vdwg.mxu0
        %v983 = vsel %vm576, %v892, 0
        %985 = vmatprep.subr.mxu0 0.0
        %986 = vmatpush1.msra.mxu0 0.0
        %987 = vmatprep.subr.mxu0 0.0
        %988 = vmatpush1.msra.mxu0 0.0
        %989 = vmatprep.subr.mxu0 0.0
        %990 = vmatpush1.msra.mxu0 0.0
        %991 = vmatprep.subr.mxu0 0.0
        %992 = vmatpush1.msra.mxu0 0.0
        %993 = vmatprep.subr.mxu0 0.0
        %994 = vmatpush1.msra.mxu0 0.0
        %995 = vmatprep.subr.mxu0 0.0
        %996 = vmatpush1.msra.mxu0 0.0
        %997 = vmatprep.subr.mxu0 0.0
        %998 = vmatpush1.msra.mxu0 0.0
        %999 = vmatprep.subr.mxu0 0.0
        %1000 = vmatpush1.msra.mxu0 0.0
        %1001 = vmatprep.subr.mxu0 0.0
        %1002 = vmatpush1.msra.mxu0 0.0
        %1003 = vmatprep.subr.mxu0 0.0
        %1004 = vmatpush1.msra.mxu0 0.0
        %1005 = vmatprep.subr.mxu0 0.0
        %1006 = vmatpush1.msra.mxu0 0.0
        %1007 = vmatprep.subr.mxu0 0.0
        %1008 = vmatpush1.msra.mxu0 0.0
        %1009 = vmatprep.subr.mxu0 0.0
        %1010 = vmatpush1.msra.mxu0 0.0
        %1011 = vmatprep.subr.mxu0 0.0
        %1012 = vmatpush1.msra.mxu0 0.0
        %1013 = vmatprep.subr.mxu0 0.0
        %1014 = vmatpush1.msra.mxu0 0.0
        %1015 = vmatprep.subr.mxu0 0.0
        %1016 = vmatpush1.msra.mxu0 %v568
        %1017 = vmatprep.subr.mxu0 0.0
        %1018 = vmatpush2.msra.mxu0 0.0
        %1019 = vmatprep.subr.mxu0 0.0
        %1020 = vmatpush2.msra.mxu0 0.0
        %1021 = vmatprep.subr.mxu0 0.0
        %1022 = vmatpush2.msra.mxu0 0.0
        %1023 = vmatprep.subr.mxu0 0.0
        %1024 = vmatpush2.msra.mxu0 0.0
        %1025 = vmatprep.subr.mxu0 0.0
        %1026 = vmatpush2.msra.mxu0 0.0
        %1027 = vmatprep.subr.mxu0 0.0
        %1028 = vmatpush2.msra.mxu0 0.0
        %1029 = vmatprep.subr.mxu0 0.0
        %1030 = vmatpush2.msra.mxu0 0.0
        %1031 = vmatprep.subr.mxu0 0.0
        %1032 = vmatpush2.msra.mxu0 0.0
        %1033 = vmatprep.subr.mxu0 0.0
        %1034 = vmatpush2.msra.mxu0 0.0
        %1035 = vmatprep.subr.mxu0 0.0
        %1036 = vmatpush2.msra.mxu0 0.0
        %1037 = vmatprep.subr.mxu0 0.0
        %1038 = vmatpush2.msra.mxu0 0.0
        %1039 = vmatprep.subr.mxu0 0.0
        %1040 = vmatpush2.msra.mxu0 0.0
        %1041 = vmatprep.subr.mxu0 0.0
        %1042 = vmatpush2.msra.mxu0 0.0
        %1043 = vmatprep.subr.mxu0 0.0
        %1044 = vmatpush2.msra.mxu0 0.0
        %1045 = vmatprep.subr.mxu0 0.0
        %1046 = vmatpush2.msra.mxu0 0.0
        %1047 = vmatprep.subr.mxu0 0.0
        %1048 = vmatpush2.msra.mxu0 0.0
        %1049 = vmatprep.mubr.f32.mxu0 0.0
        %1050 = vmatmul.mubr.f32.gmra.mxu0 %v983
        %v1051 = vpop.f32.mrf.mxu0
        %v1052 = vadd.f32 0.0, %v1051
        %v1053 = vpop.f32.mrf.mxu0
        %1054 = vdwg.mxu0
        %v1056 = vsel %vm576, %v894, 0
        %1058 = vmatprep.subr.mxu0 0.0
        %1059 = vmatpush1.msra.mxu0 0.0
        %1060 = vmatprep.subr.mxu0 0.0
        %1061 = vmatpush1.msra.mxu0 0.0
        %1062 = vmatprep.subr.mxu0 0.0
        %1063 = vmatpush1.msra.mxu0 0.0
        %1064 = vmatprep.subr.mxu0 0.0
        %1065 = vmatpush1.msra.mxu0 0.0
        %1066 = vmatprep.subr.mxu0 0.0
        %1067 = vmatpush1.msra.mxu0 0.0
        %1068 = vmatprep.subr.mxu0 0.0
        %1069 = vmatpush1.msra.mxu0 0.0
        %1070 = vmatprep.subr.mxu0 0.0
        %1071 = vmatpush1.msra.mxu0 0.0
        %1072 = vmatprep.subr.mxu0 0.0
        %1073 = vmatpush1.msra.mxu0 0.0
        %1074 = vmatprep.subr.mxu0 0.0
        %1075 = vmatpush1.msra.mxu0 0.0
        %1076 = vmatprep.subr.mxu0 0.0
        %1077 = vmatpush1.msra.mxu0 0.0
        %1078 = vmatprep.subr.mxu0 0.0
        %1079 = vmatpush1.msra.mxu0 0.0
        %1080 = vmatprep.subr.mxu0 0.0
        %1081 = vmatpush1.msra.mxu0 0.0
        %1082 = vmatprep.subr.mxu0 0.0
        %1083 = vmatpush1.msra.mxu0 0.0
        %1084 = vmatprep.subr.mxu0 0.0
        %1085 = vmatpush1.msra.mxu0 0.0
        %1086 = vmatprep.subr.mxu0 0.0
        %1087 = vmatpush1.msra.mxu0 0.0
        %1088 = vmatprep.subr.mxu0 0.0
        %1089 = vmatpush1.msra.mxu0 %v571
        %1090 = vmatprep.subr.mxu0 0.0
        %1091 = vmatpush2.msra.mxu0 0.0
        %1092 = vmatprep.subr.mxu0 0.0
        %1093 = vmatpush2.msra.mxu0 0.0
        %1094 = vmatprep.subr.mxu0 0.0
        %1095 = vmatpush2.msra.mxu0 0.0
        %1096 = vmatprep.subr.mxu0 0.0
        %1097 = vmatpush2.msra.mxu0 0.0
        %1098 = vmatprep.subr.mxu0 0.0
        %1099 = vmatpush2.msra.mxu0 0.0
        %1100 = vmatprep.subr.mxu0 0.0
        %1101 = vmatpush2.msra.mxu0 0.0
        %1102 = vmatprep.subr.mxu0 0.0
        %1103 = vmatpush2.msra.mxu0 0.0
        %1104 = vmatprep.subr.mxu0 0.0
        %1105 = vmatpush2.msra.mxu0 0.0
        %1106 = vmatprep.subr.mxu0 0.0
        %1107 = vmatpush2.msra.mxu0 0.0
        %1108 = vmatprep.subr.mxu0 0.0
        %1109 = vmatpush2.msra.mxu0 0.0
        %1110 = vmatprep.subr.mxu0 0.0
        %1111 = vmatpush2.msra.mxu0 0.0
        %1112 = vmatprep.subr.mxu0 0.0
        %1113 = vmatpush2.msra.mxu0 0.0
        %1114 = vmatprep.subr.mxu0 0.0
        %1115 = vmatpush2.msra.mxu0 0.0
        %1116 = vmatprep.subr.mxu0 0.0
        %1117 = vmatpush2.msra.mxu0 0.0
        %1118 = vmatprep.subr.mxu0 0.0
        %1119 = vmatpush2.msra.mxu0 0.0
        %1120 = vmatprep.subr.mxu0 0.0
        %1121 = vmatpush2.msra.mxu0 0.0
        %1122 = vmatprep.mubr.f32.mxu0 0.0
        %1123 = vmatmul.mubr.f32.gmra.mxu0 %v1056
        %v1124 = vpop.f32.mrf.mxu0
        %v1125 = vadd.f32 0.0, %v1124
        %v1126 = vpop.f32.mrf.mxu0
        %1127 = vdwg.mxu0
        %v1129 = vsel %vm576, %v896, 0
        %1131 = vmatprep.subr.mxu0 0.0
        %1132 = vmatpush1.msra.mxu0 0.0
        %1133 = vmatprep.subr.mxu0 0.0
        %1134 = vmatpush1.msra.mxu0 0.0
        %1135 = vmatprep.subr.mxu0 0.0
        %1136 = vmatpush1.msra.mxu0 0.0
        %1137 = vmatprep.subr.mxu0 0.0
        %1138 = vmatpush1.msra.mxu0 0.0
        %1139 = vmatprep.subr.mxu0 0.0
        %1140 = vmatpush1.msra.mxu0 0.0
        %1141 = vmatprep.subr.mxu0 0.0
        %1142 = vmatpush1.msra.mxu0 0.0
        %1143 = vmatprep.subr.mxu0 0.0
        %1144 = vmatpush1.msra.mxu0 0.0
        %1145 = vmatprep.subr.mxu0 0.0
        %1146 = vmatpush1.msra.mxu0 0.0
        %1147 = vmatprep.subr.mxu0 0.0
        %1148 = vmatpush1.msra.mxu0 0.0
        %1149 = vmatprep.subr.mxu0 0.0
        %1150 = vmatpush1.msra.mxu0 0.0
        %1151 = vmatprep.subr.mxu0 0.0
        %1152 = vmatpush1.msra.mxu0 0.0
        %1153 = vmatprep.subr.mxu0 0.0
        %1154 = vmatpush1.msra.mxu0 0.0
        %1155 = vmatprep.subr.mxu0 0.0
        %1156 = vmatpush1.msra.mxu0 0.0
        %1157 = vmatprep.subr.mxu0 0.0
        %1158 = vmatpush1.msra.mxu0 0.0
        %1159 = vmatprep.subr.mxu0 0.0
        %1160 = vmatpush1.msra.mxu0 0.0
        %1161 = vmatprep.subr.mxu0 0.0
        %1162 = vmatpush1.msra.mxu0 %v574
        %1163 = vmatprep.subr.mxu0 0.0
        %1164 = vmatpush2.msra.mxu0 0.0
        %1165 = vmatprep.subr.mxu0 0.0
        %1166 = vmatpush2.msra.mxu0 0.0
        %1167 = vmatprep.subr.mxu0 0.0
        %1168 = vmatpush2.msra.mxu0 0.0
        %1169 = vmatprep.subr.mxu0 0.0
        %1170 = vmatpush2.msra.mxu0 0.0
        %1171 = vmatprep.subr.mxu0 0.0
        %1172 = vmatpush2.msra.mxu0 0.0
        %1173 = vmatprep.subr.mxu0 0.0
        %1174 = vmatpush2.msra.mxu0 0.0
        %1175 = vmatprep.subr.mxu0 0.0
        %1176 = vmatpush2.msra.mxu0 0.0
        %1177 = vmatprep.subr.mxu0 0.0
        %1178 = vmatpush2.msra.mxu0 0.0
        %1179 = vmatprep.subr.mxu0 0.0
        %1180 = vmatpush2.msra.mxu0 0.0
        %1181 = vmatprep.subr.mxu0 0.0
        %1182 = vmatpush2.msra.mxu0 0.0
        %1183 = vmatprep.subr.mxu0 0.0
        %1184 = vmatpush2.msra.mxu0 0.0
        %1185 = vmatprep.subr.mxu0 0.0
        %1186 = vmatpush2.msra.mxu0 0.0
        %1187 = vmatprep.subr.mxu0 0.0
        %1188 = vmatpush2.msra.mxu0 0.0
        %1189 = vmatprep.subr.mxu0 0.0
        %1190 = vmatpush2.msra.mxu0 0.0
        %1191 = vmatprep.subr.mxu0 0.0
        %1192 = vmatpush2.msra.mxu0 0.0
        %1193 = vmatprep.subr.mxu0 0.0
        %1194 = vmatpush2.msra.mxu0 0.0
        %1195 = vmatprep.mubr.f32.mxu0 0.0
        %1196 = vmatmul.mubr.f32.gmra.mxu0 %v1129
        %v1197 = vpop.f32.mrf.mxu0
        %v1198 = vadd.f32 0.0, %v1197
        %v1199 = vpop.f32.mrf.mxu0
        %1200 = vdwg.mxu0
        %v1201 = vrcp.pop %v899
        %v1202 = vrcp.pop %v902
        %v1203 = vrcp.pop %v905
        %v1204 = vrcp.pop %v908
        %v1205 = vmul.f32 %v979, %v1201
        %v1206 = vmul.f32 %v1052, %v1202
        %v1207 = vmul.f32 %v1125, %v1203
        %v1208 = vmul.f32 %v1198, %v1204
        %1210 = vrot.lane.b32.xlu0 %v1206, 8
        %v1211 = vpop.permute.xlu0 %1210
        %1214 = vrot.lane.b32.xlu0 %v1207, 16
        %v1215 = vpop.permute.xlu0 %1214
        %1218 = vrot.lane.b32.xlu0 %v1208, 24
        %v1219 = vpop.permute.xlu0 %1218
        %v1221 = vsel %vm576, %v1205, %v1211
        %vm1222 = vcmask 130048
        %v1223 = vsel %vm1222, %v1221, %v1215
        %vm1224 = vcmask 195584
        %v1225 = vsel %vm1224, %v1223, %v1219
        %v1226 = vld [vmem:[#allocation10] sm:$0xff]
        %v1227 = vld [vmem:[#allocation10 + $0x8] sm:$0xff]
        %v1228 = vld [vmem:[#allocation10 + $0x10] sm:$0xff]
        %v1229 = vld [vmem:[#allocation10 + $0x18] sm:$0xff]
        %v1230 = vld [vmem:[%s5] sm:$0x1]
        %v1232 = vlaneseq
        %v1233 = vshrl.u32 %v1232, 7
        %v1234 = vsub.s32 0, %v1233
        %v1235 = vrot.slane %v1230, %v1234
        %v1238 = vsel %vm330, %v1225, 0
        %1240 = vmatprep.subr.mxu0 0.0
        %1241 = vmatpush1.msra.mxu0 0.0
        %1242 = vmatprep.subr.mxu0 0.0
        %1243 = vmatpush1.msra.mxu0 0.0
        %1244 = vmatprep.subr.mxu0 0.0
        %1245 = vmatpush1.msra.mxu0 0.0
        %1246 = vmatprep.subr.mxu0 0.0
        %1247 = vmatpush1.msra.mxu0 0.0
        %1248 = vmatprep.subr.mxu0 0.0
        %1249 = vmatpush1.msra.mxu0 0.0
        %1250 = vmatprep.subr.mxu0 0.0
        %1251 = vmatpush1.msra.mxu0 0.0
        %1252 = vmatprep.subr.mxu0 0.0
        %1253 = vmatpush1.msra.mxu0 0.0
        %1254 = vmatprep.subr.mxu0 0.0
        %1255 = vmatpush1.msra.mxu0 0.0
        %1256 = vmatprep.subr.mxu0 0.0
        %1257 = vmatpush1.msra.mxu0 0.0
        %1258 = vmatprep.subr.mxu0 0.0
        %1259 = vmatpush1.msra.mxu0 0.0
        %1260 = vmatprep.subr.mxu0 0.0
        %1261 = vmatpush1.msra.mxu0 0.0
        %1262 = vmatprep.subr.mxu0 0.0
        %1263 = vmatpush1.msra.mxu0 0.0
        %1264 = vmatprep.subr.mxu0 0.0
        %1265 = vmatpush1.msra.mxu0 %v1229
        %1266 = vmatprep.subr.mxu0 0.0
        %1267 = vmatpush1.msra.mxu0 %v1228
        %1268 = vmatprep.subr.mxu0 0.0
        %1269 = vmatpush1.msra.mxu0 %v1227
        %1270 = vmatprep.subr.mxu0 0.0
        %1271 = vmatpush1.msra.mxu0 %v1226
        %1272 = vmatprep.subr.mxu0 0.0
        %1273 = vmatpush2.msra.mxu0 0.0
        %1274 = vmatprep.subr.mxu0 0.0
        %1275 = vmatpush2.msra.mxu0 0.0
        %1276 = vmatprep.subr.mxu0 0.0
        %1277 = vmatpush2.msra.mxu0 0.0
        %1278 = vmatprep.subr.mxu0 0.0
        %1279 = vmatpush2.msra.mxu0 0.0
        %1280 = vmatprep.subr.mxu0 0.0
        %1281 = vmatpush2.msra.mxu0 0.0
        %1282 = vmatprep.subr.mxu0 0.0
        %1283 = vmatpush2.msra.mxu0 0.0
        %1284 = vmatprep.subr.mxu0 0.0
        %1285 = vmatpush2.msra.mxu0 0.0
        %1286 = vmatprep.subr.mxu0 0.0
        %1287 = vmatpush2.msra.mxu0 0.0
        %1288 = vmatprep.subr.mxu0 0.0
        %1289 = vmatpush2.msra.mxu0 0.0
        %1290 = vmatprep.subr.mxu0 0.0
        %1291 = vmatpush2.msra.mxu0 0.0
        %1292 = vmatprep.subr.mxu0 0.0
        %1293 = vmatpush2.msra.mxu0 0.0
        %1294 = vmatprep.subr.mxu0 0.0
        %1295 = vmatpush2.msra.mxu0 0.0
        %1296 = vmatprep.subr.mxu0 0.0
        %1297 = vmatpush2.msra.mxu0 0.0
        %1298 = vmatprep.subr.mxu0 0.0
        %1299 = vmatpush2.msra.mxu0 0.0
        %1300 = vmatprep.subr.mxu0 0.0
        %1301 = vmatpush2.msra.mxu0 0.0
        %1302 = vmatprep.subr.mxu0 0.0
        %1303 = vmatpush2.msra.mxu0 0.0
        %1304 = vmatprep.mubr.f32.mxu0 0.0
        %1305 = vmatmul.mubr.f32.gmra.mxu0 %v1238
        %v1306 = vpop.f32.mrf.mxu0
        %v1307 = vadd.f32 %v1235, %v1306
        %v1308 = vpop.f32.mrf.mxu0
        %1309 = vdwg.mxu0
        %1310 = vst.msk [vmem:[%s324] sm:$0xff] %vm330, %v1307
        %s1311 = sand.u32 %s164, 1
        %s1312 = scalar_lea.sflag [#allocation4], %s1311
        %s1313 = sand.u32 %s164, 1
        %s1314 = smul.addr %s1313, 8
        %s1315 = scalar_lea.vmem [#allocation11], %s1314
        // Predicated region
        $region65: #{tpu_custom_call.1} parent=43 // pred_check
          %p1316 = pneg %p174
        $region66: #{tpu_custom_call.1} parent=43 // pred_check_branch
          %1318 = sbr.rel (%p1316) target = $region68
        $region67: #{tpu_custom_call.1} parent=43 // pred_region
          %s1320 = ssub.s32 128, 128
          %1321 = vsyncadd %s1312, %s1320
          %s1322 = smul.addr %s25, 128
          %s1323 = scalar_lea.hbm %s6, %s1322
          %s1325 = sshll.u32 %s1315, 4
          %s1326 = int_to_ptr.vmem [resolvable:$true] %s1325
          %1328 = dma.vmem_to_hbm [thread:$0]  %s1326, 128, %s1323, %s1312
        $region68: #{tpu_custom_call.1} parent=43 // pred_fallthru
          _
      $region44: #{tpu_custom_call.1} parent=5 // pred_fallthru
        _
      %p1329 = scmp.le.s32.totalorder 2, %s20
      // Predicated region
      $region69: #{tpu_custom_call.1} parent=5 // pred_check
        %p1330 = pneg %p1329
      $region70: #{tpu_custom_call.1} parent=5 // pred_check_branch
        %1332 = sbr.rel (%p1330) target = $region72
      $region71: #{tpu_custom_call.1} parent=5 // pred_region
        %s1333 = ssub.s32 %s20, 2
        // Predicated region
        $region73: #{tpu_custom_call.1} parent=71 // pred_check
          %p1334 = pneg %p180
        $region74: #{tpu_custom_call.1} parent=71 // pred_check_branch
          %1336 = sbr.rel (%p1334) target = $region76
        $region75: #{tpu_custom_call.1} parent=71 // pred_region
          %s1337 = sand.u32 %s165, 1
          %s1338 = scalar_lea.sflag [#allocation4], %s1337
          %s1339 = sand.u32 %s165, 1
          %s1340 = smul.addr %s1339, 8
          %s1341 = scalar_lea.vmem [#allocation11], %s1340
          %1342 = dma.done %s1338, 128
        $region76: #{tpu_custom_call.1} parent=71 // pred_fallthru
          _
      $region72: #{tpu_custom_call.1} parent=5 // pred_fallthru
        _
    $region6: #{tpu_custom_call.1} parent=1 // loop_footer
      %s24 = sadd.s32 1, %s20
    $region7: #{tpu_custom_call.1} parent=1 // loop_footer_branch
      %19 = sbr.rel target = $region3
    $region8: #{tpu_custom_call.1} parent=1 // loop_exit
      _
    %1343 = vsyncpa [#allocation3], 1
    %s1344 = scalar_lea.sflag [#allocation3], 1
    %1345 = vsyncpa %s1344, 1
    %1346 = vsyncpa [#allocation6], 1
    %1347 = vsyncpa [#allocation9], 1
    %1348 = vsyncpa [#allocation4], 1
    %s1349 = scalar_lea.sflag [#allocation4], 1
    %1350 = vsyncpa %s1349, 1

</llo_original>
